<compile_context>
chip_gen: v7x
topology: tpu7x:2x2x1
jax: 0.10.0
libtpu: 0.0.40
codegen_flags: <defaults>
</compile_context>

<pallas_src>
import jax
import jax.numpy as jnp
from jax.experimental import pallas as pl
from jax.experimental.pallas import tpu as pltpu


_LAYER_ORDER = ('conv1', 'relu1', 'pool1', 'conv2', 'relu2', 'pool2', 'fc')


def _round_up(n, m):
    return ((n + m - 1) // m) * m


# ------------------------- build-time constant prep -------------------------

def _conv_weight_cat(w, cin_pad):
    """(Cout, Cin, 3, 3) -> (Cout, 9*cin_pad); column t*cin_pad+ci = w[:,ci,ky,kx]."""
    cout, cin, _, _ = w.shape
    taps = jnp.transpose(w, (2, 3, 0, 1)).reshape(9, cout, cin)        # [t, co, ci]
    taps = jnp.pad(taps, ((0, 0), (0, 0), (0, cin_pad - cin)))
    return jnp.transpose(taps, (1, 0, 2)).reshape(cout, 9 * cin_pad)


def _tap_mask_stack(N, H, W, cin_pad):
    """(9*cin_pad, N*H*W) 0/1 mask: zero where tap (dy,dx) falls outside the image."""
    L = N * H * W
    lane = jnp.arange(L)
    x = lane % W
    y = (lane // W) % H
    rows = []
    for ky in range(3):
        for kx in range(3):
            dy, dx = ky - 1, kx - 1
            valid = ((x + dx >= 0) & (x + dx < W) & (y + dy >= 0) & (y + dy < H))
            rows.append(jnp.broadcast_to(valid.astype(jnp.float32), (cin_pad, L)))
    return jnp.concatenate(rows, axis=0)


def _pool_matrix(N, H, W):
    """(N*H*W, N*Ho*Wo) one-hot*0.25 matrix implementing AvgPool2d(2) on the lane axis."""
    Ho, Wo = H // 2, W // 2
    S, So = H * W, Ho * Wo
    li = jnp.arange(N * S)
    lo = jnp.arange(N * So)
    ni, yi, xi = li // S, (li // W) % H, li % W
    no, yo, xo = lo // So, (lo // Wo) % Ho, lo % Wo
    same = ((ni[:, None] == no[None, :]) &
            ((yi // 2)[:, None] == yo[None, :]) &
            ((xi // 2)[:, None] == xo[None, :]))
    return jnp.where(same, 0.25, 0.0).astype(jnp.float32)


def _flatten_matrices(N, C, S):
    """Spread (N*S, N*K) and channel-select (C, N*K) matrices for torch's view(N,-1)."""
    K = C * S
    l = jnp.arange(N * S)
    m = jnp.arange(N * K)
    bsp = (l[:, None] == ((m // K) * S + (m % S))[None, :]).astype(jnp.float32)
    c = jnp.arange(C)
    msel = (c[:, None] == ((m % K) // S)[None, :]).astype(jnp.float32)
    return bsp, msel


def _prep_consts(params, N, Cin, H, W):
    f32 = jnp.float32
    C1 = params['conv1_w'].shape[0]
    C2 = params['conv2_w'].shape[0]
    O = params['fc_w'].shape[0]
    H2, W2 = H // 2, W // 2
    H3, W3 = H2 // 2, W2 // 2
    S3 = H3 * W3

    cin1_pad = _round_up(Cin, 8)    # pad conv1 input channels to a sublane tile
    cin2_pad = C1                   # conv2 input rows = C1 (8 here, already aligned)

    w1 = _conv_weight_cat(params['conv1_w'].astype(f32), cin1_pad)
    b1 = params['conv1_b'].astype(f32).reshape(C1, 1)
    m1 = _tap_mask_stack(N, H, W, cin1_pad)
    p1 = _pool_matrix(N, H, W)

    w2 = _conv_weight_cat(params['conv2_w'].astype(f32), cin2_pad)
    b2 = params['conv2_b'].astype(f32).reshape(C2, 1)
    m2 = _tap_mask_stack(N, H2, W2, cin2_pad)
    p2 = _pool_matrix(N, H2, W2)

    bsp, msel = _flatten_matrices(N, C2, S3)
    wfc_blk = jnp.kron(jnp.eye(N, dtype=f32),
                       jnp.transpose(params['fc_w'].astype(f32)))      # (N*K, N*O)
    bfc_rep = jnp.tile(params['fc_b'].astype(f32), (N,)).reshape(1, N * O)

    consts = (w1, b1, m1, p1, w2, b2, m2, p2, bsp, msel, wfc_blk, bfc_rep)
    return consts, cin1_pad


# ------------------------------ fused kernel --------------------------------

def _make_fused_kernel(W1, W2, emit):
    """W1/W2: image widths at conv1/conv2 resolution; emit: ordered layer names."""

    def conv3x3(a, w_ref, b_ref, m_ref, img_w):
        # a: (Cin, N*S); w_ref: (Cout, 9*Cin); m_ref: (9*Cin, N*S); b_ref: (Cout, 1)
        L = a.shape[1]
        pieces = []
        for ky in range(3):
            for kx in range(3):
                d = (ky - 1) * img_w + (kx - 1)
                if d == 0:
                    pieces.append(a)
                else:
                    # lane rotate (XLU); wraps / out-of-image taps are zeroed by m_ref
                    pieces.append(pltpu.roll(a, shift=(-d) % L, axis=1))
        stack = jnp.concatenate(pieces, axis=0) * m_ref[...]           # (9*Cin, N*S)
        return (jnp.dot(w_ref[...], stack, preferred_element_type=jnp.float32)
                + b_ref[...])

    def kernel(x_ref, w1_ref, b1_ref, m1_ref, p1_ref,
               w2_ref, b2_ref, m2_ref, p2_ref,
               bsp_ref, msel_ref, wfc_ref, bfc_ref, *out_refs):
        vals = {}
        a = x_ref[...].astype(jnp.float32)                 # (Cin_pad, N*H*W)
        a = conv3x3(a, w1_ref, b1_ref, m1_ref, W1)         # (C1, N*H*W)
        vals['conv1'] = a
        a = jnp.maximum(a, 0.0)                            # relu1 (fused, VPU)
        vals['relu1'] = a
        a = jnp.dot(a, p1_ref[...], preferred_element_type=jnp.float32)
        vals['pool1'] = a                                  # (C1, N*H2*W2)
        a = conv3x3(a, w2_ref, b2_ref, m2_ref, W2)         # (C2, N*H2*W2)
        vals['conv2'] = a
        a = jnp.maximum(a, 0.0)                            # relu2 (fused, VPU)
        vals['relu2'] = a
        a = jnp.dot(a, p2_ref[...], preferred_element_type=jnp.float32)  # (C2, N*S3)

        # flatten (torch x.view(N, -1)) without a batch loop: spread + select + reduce,
        # all on the MXU/VPU; q is lane-dense (1, N*C2*S3) in torch row-major order.
        t = jnp.dot(a, bsp_ref[...], preferred_element_type=jnp.float32)
        t = t * msel_ref[...]
        q = jnp.dot(jnp.ones((1, t.shape[0]), jnp.float32), t,
                    preferred_element_type=jnp.float32)    # (1, N*K)
        vals['pool2'] = q
        y = (jnp.dot(q, wfc_ref[...], preferred_element_type=jnp.float32)
             + bfc_ref[...])                               # (1, N*O)
        vals['fc'] = y

        for name, ref in zip(emit, out_refs):
            ref[...] = vals[name].astype(ref.dtype)

    return kernel


def _out_layouts(N, C1, C2, O, H, W):
    """kernel-side 2-D shape + wrapper conversion per layer (lane-dense outputs)."""
    H2, W2 = H // 2, W // 2
    H3, W3 = H2 // 2, W2 // 2
    K = C2 * H3 * W3
    return {
        'conv1': ((C1, N * H * W),   'chw',  (N, C1, H, W)),
        'relu1': ((C1, N * H * W),   'chw',  (N, C1, H, W)),
        'pool1': ((C1, N * H2 * W2), 'chw',  (N, C1, H2, W2)),
        'conv2': ((C2, N * H2 * W2), 'chw',  (N, C2, H2, W2)),
        'relu2': ((C2, N * H2 * W2), 'chw',  (N, C2, H2, W2)),
        'pool2': ((1, N * K),        'flat', (N, C2, H3, W3)),
        'fc':    ((1, N * O),        'flat', (N, O)),
    }


def build_fused_forward(params, emit, x_shape, x_dtype):
    """Build a jitted forward: x -> [extracted outputs], one pallas_call total."""
    N, Cin, H, W = x_shape
    C1 = params['conv1_w'].shape[0]
    C2 = params['conv2_w'].shape[0]
    O = params['fc_w'].shape[0]
    assert H % 4 == 0 and W % 4 == 0, "two 2x2 pools need H, W divisible by 4"
    assert params['conv1_w'].shape[1] == Cin
    assert params['conv2_w'].shape[1] == C1
    assert params['fc_w'].shape[1] == C2 * (H // 4) * (W // 4)

    if not emit:
        return lambda x: []

    consts, cin1_pad = _prep_consts(params, N, Cin, H, W)   # one-time, tiny
    layouts = _out_layouts(N, C1, C2, O, H, W)
    kernel = _make_fused_kernel(W, W // 2, emit)

    kern_shapes = [layouts[name][0] for name in emit]

    def full_spec(shape):
        return pl.BlockSpec(tuple(shape), lambda *_: (0,) * len(shape))

    in_shapes = [(cin1_pad, N * H * W)] + [tuple(c.shape) for c in consts]

    fused = pl.pallas_call(
        kernel,
        out_shape=[jax.ShapeDtypeStruct(s, x_dtype) for s in kern_shapes],
        in_specs=[full_spec(s) for s in in_shapes],
        out_specs=[full_spec(s) for s in kern_shapes],
    )

    def forward(x):
        # NCHW -> (Cin, N*H*W), lanes ordered (n, y, x); pad channels to sublane tile.
        x2d = jnp.transpose(x, (1, 0, 2, 3)).reshape(Cin, N * H * W)
        x2d = jnp.pad(x2d, ((0, cin1_pad - Cin), (0, 0)))
        outs = fused(x2d, *consts)
        results = []
        for o, name in zip(outs, emit):
            _, kind, ts = layouts[name]
            if kind == 'chw':       # (C, N*h*w) -> NCHW: tiny XLA reshape+transpose
                n_b, c, h, w = ts
                results.append(o.reshape(c, n_b, h, w).transpose(1, 0, 2, 3))
            else:                   # already torch row-major: free reshape
                results.append(o.reshape(ts))
        return results

    return jax.jit(forward)


# -------------------------- FeatureExtractor port ---------------------------

class Submodule:
    """Synthetic CNN standing in for the PyTorch `submodule` (its _modules)."""

    def __init__(self, params):
        self.params = params
        self._modules = {name: name for name in _LAYER_ORDER}


class FeatureExtractor:
    def __init__(self, submodule, extracted_layers):
        self.submodule = submodule
        self.extracted_layers = extracted_layers
        self._cache = {}

    def forward(self, x):
        # Same semantics as the torch module: walk named children in order,
        # flatten before 'fc', collect outputs whose name is in extracted_layers.
        # The walk is resolved at build time; the compute runs as ONE fused
        # Pallas kernel emitting exactly the requested layer outputs.
        emit = tuple(name for name in self.submodule._modules
                     if name in self.extracted_layers)
        key = (x.shape, str(x.dtype), emit)
        if key not in self._cache:
            self._cache[key] = build_fused_forward(
                self.submodule.params, emit, x.shape, x.dtype)
        return self._cache[key](x)


# ------------------------------ pure-JAX reference --------------------------

def reference_forward(x, params, extracted):
    def conv_ref(x, w, b):
        y = jax.lax.conv_general_dilated(
            x, w, (1, 1), ((1, 1), (1, 1)),
            dimension_numbers=('NCHW', 'OIHW', 'NCHW'))
        return y + b[None, :, None, None]

    def pool_ref(x):
        return jax.lax.reduce_window(x, 0.0, jax.lax.add,
                                     (1, 1, 2, 2), (1, 1, 2, 2), 'VALID') * 0.25

    mods = {
        'conv1': lambda t: conv_ref(t, params['conv1_w'], params['conv1_b']),
        'relu1': lambda t: jnp.maximum(t, 0),
        'pool1': pool_ref,
        'conv2': lambda t: conv_ref(t, params['conv2_w'], params['conv2_b']),
        'relu2': lambda t: jnp.maximum(t, 0),
        'pool2': pool_ref,
        'fc':    lambda t: t @ params['fc_w'].T + params['fc_b'],
    }
    outs = []
    for name, fn in mods.items():
        if name == 'fc':
            x = x.reshape(x.shape[0], -1)
        x = fn(x)
        if name in extracted:
            outs.append(x)
    return outs


# ----------------------------------- main ------------------------------------

if __name__ == "__main__":
    key = jax.random.PRNGKey(0)
    k1, k2, k3, k4, k5, k6, kx = jax.random.split(key, 7)
    params = {
        'conv1_w': jax.random.normal(k1, (8, 4, 3, 3), jnp.float32) * 0.1,
        'conv1_b': jax.random.normal(k2, (8,), jnp.float32) * 0.1,
        'conv2_w': jax.random.normal(k3, (16, 8, 3, 3), jnp.float32) * 0.1,
        'conv2_b': jax.random.normal(k4, (16,), jnp.float32) * 0.1,
        'fc_w':    jax.random.normal(k5, (10, 16 * 4 * 4), jnp.float32) * 0.1,
        'fc_b':    jax.random.normal(k6, (10,), jnp.float32) * 0.1,
    }
    x = jax.random.normal(kx, (2, 4, 16, 16), jnp.float32)   # NCHW

    extracted_layers = ['relu1', 'pool2', 'fc']
    fe = FeatureExtractor(Submodule(params), extracted_layers)

    outs = fe.forward(x)
    outs = [jax.block_until_ready(o) for o in outs]

    refs = reference_forward(x, params, extracted_layers)
    assert len(outs) == len(refs) == 3
    expected_shapes = [(2, 8, 16, 16), (2, 16, 4, 4), (2, 10)]
    for o, r, s in zip(outs, refs, expected_shapes):
        assert o.shape == s, (o.shape, s)
        assert jnp.allclose(o, r, rtol=1e-4, atol=1e-4), "mismatch vs reference"

    print("KERNEL_OK")
</pallas_src>

<mosaic_0001>
module attributes {stable_mosaic.version = 11 : i64} {
  func.func @kernel(%arg0: memref<8x512xf32, #tpu.memory_space<vmem>>, %arg1: memref<8x72xf32, #tpu.memory_space<vmem>>, %arg2: memref<8x1xf32, #tpu.memory_space<vmem>>, %arg3: memref<72x512xf32, #tpu.memory_space<vmem>>, %arg4: memref<512x128xf32, #tpu.memory_space<vmem>>, %arg5: memref<16x72xf32, #tpu.memory_space<vmem>>, %arg6: memref<16x1xf32, #tpu.memory_space<vmem>>, %arg7: memref<72x128xf32, #tpu.memory_space<vmem>>, %arg8: memref<128x32xf32, #tpu.memory_space<vmem>>, %arg9: memref<32x512xf32, #tpu.memory_space<vmem>>, %arg10: memref<16x512xf32, #tpu.memory_space<vmem>>, %arg11: memref<512x20xf32, #tpu.memory_space<vmem>>, %arg12: memref<1x20xf32, #tpu.memory_space<vmem>>, %arg13: memref<8x512xf32, #tpu.memory_space<vmem>>, %arg14: memref<1x512xf32, #tpu.memory_space<vmem>>, %arg15: memref<1x20xf32, #tpu.memory_space<vmem>>) attributes {dimension_semantics = [], scalar_prefetch = 0 : i64, scratch_operands = 0 : i64, tpu.core_type = #tpu.core_type<tc>} {
    %c0 = arith.constant 0 : index
    %c0_0 = arith.constant 0 : index
    %0 = vector.load %arg0[%c0, %c0_0] : memref<8x512xf32, #tpu.memory_space<vmem>>, vector<8x512xf32>
    %c17_i32 = arith.constant 17 : i32
    %1 = tpu.dynamic_rotate %0 by %c17_i32 dim 1 : vector<8x512xf32>, i32 -> vector<8x512xf32>
    %c16_i32 = arith.constant 16 : i32
    %2 = tpu.dynamic_rotate %0 by %c16_i32 dim 1 : vector<8x512xf32>, i32 -> vector<8x512xf32>
    %c15_i32 = arith.constant 15 : i32
    %3 = tpu.dynamic_rotate %0 by %c15_i32 dim 1 : vector<8x512xf32>, i32 -> vector<8x512xf32>
    %c1_i32 = arith.constant 1 : i32
    %4 = tpu.dynamic_rotate %0 by %c1_i32 dim 1 : vector<8x512xf32>, i32 -> vector<8x512xf32>
    %c511_i32 = arith.constant 511 : i32
    %5 = tpu.dynamic_rotate %0 by %c511_i32 dim 1 : vector<8x512xf32>, i32 -> vector<8x512xf32>
    %c497_i32 = arith.constant 497 : i32
    %6 = tpu.dynamic_rotate %0 by %c497_i32 dim 1 : vector<8x512xf32>, i32 -> vector<8x512xf32>
    %c496_i32 = arith.constant 496 : i32
    %7 = tpu.dynamic_rotate %0 by %c496_i32 dim 1 : vector<8x512xf32>, i32 -> vector<8x512xf32>
    %c495_i32 = arith.constant 495 : i32
    %8 = tpu.dynamic_rotate %0 by %c495_i32 dim 1 : vector<8x512xf32>, i32 -> vector<8x512xf32>
    %9 = tpu.concatenate %1, %2, %3, %4, %0, %5, %6, %7, %8 in 0 : vector<8x512xf32>, vector<8x512xf32>, vector<8x512xf32>, vector<8x512xf32>, vector<8x512xf32>, vector<8x512xf32>, vector<8x512xf32>, vector<8x512xf32>, vector<8x512xf32> -> vector<72x512xf32>
    %c0_1 = arith.constant 0 : index
    %c0_2 = arith.constant 0 : index
    %10 = vector.load %arg3[%c0_1, %c0_2] : memref<72x512xf32, #tpu.memory_space<vmem>>, vector<72x512xf32>
    %11 = arith.mulf %9, %10 : vector<72x512xf32>
    %c0_3 = arith.constant 0 : index
    %c0_4 = arith.constant 0 : index
    %12 = vector.load %arg1[%c0_3, %c0_4] : memref<8x72xf32, #tpu.memory_space<vmem>>, vector<8x72xf32>
    %cst = arith.constant dense<0.000000e+00> : vector<8x512xf32>
    %13 = tpu.matmul %12, %11, %cst {dimension_numbers = #tpu.dot_dimension_numbers<[1], [0], [0], [1], [0, 0, 1, 1], [], []>} : vector<8x72xf32>, vector<72x512xf32>, vector<8x512xf32> -> vector<8x512xf32>
    %c0_5 = arith.constant 0 : index
    %c0_6 = arith.constant 0 : index
    %14 = vector.load %arg2[%c0_5, %c0_6] : memref<8x1xf32, #tpu.memory_space<vmem>>, vector<8x1xf32>
    %15 = vector.broadcast %14 : vector<8x1xf32> to vector<8x512xf32>
    %16 = arith.addf %13, %15 : vector<8x512xf32>
    %cst_7 = arith.constant 0.000000e+00 : f32
    %17 = vector.broadcast %cst_7 : f32 to vector<8x512xf32>
    %18 = arith.maximumf %16, %17 : vector<8x512xf32>
    %c0_8 = arith.constant 0 : index
    %c0_9 = arith.constant 0 : index
    %19 = vector.load %arg4[%c0_8, %c0_9] : memref<512x128xf32, #tpu.memory_space<vmem>>, vector<512x128xf32>
    %cst_10 = arith.constant dense<0.000000e+00> : vector<8x128xf32>
    %20 = tpu.matmul %18, %19, %cst_10 {dimension_numbers = #tpu.dot_dimension_numbers<[1], [0], [0], [1], [0, 0, 1, 1], [], []>} : vector<8x512xf32>, vector<512x128xf32>, vector<8x128xf32> -> vector<8x128xf32>
    %c9_i32 = arith.constant 9 : i32
    %21 = tpu.dynamic_rotate %20 by %c9_i32 dim 1 : vector<8x128xf32>, i32 -> vector<8x128xf32>
    %c8_i32 = arith.constant 8 : i32
    %22 = tpu.dynamic_rotate %20 by %c8_i32 dim 1 : vector<8x128xf32>, i32 -> vector<8x128xf32>
    %c7_i32 = arith.constant 7 : i32
    %23 = tpu.dynamic_rotate %20 by %c7_i32 dim 1 : vector<8x128xf32>, i32 -> vector<8x128xf32>
    %c1_i32_11 = arith.constant 1 : i32
    %24 = tpu.dynamic_rotate %20 by %c1_i32_11 dim 1 : vector<8x128xf32>, i32 -> vector<8x128xf32>
    %c127_i32 = arith.constant 127 : i32
    %25 = tpu.dynamic_rotate %20 by %c127_i32 dim 1 : vector<8x128xf32>, i32 -> vector<8x128xf32>
    %c121_i32 = arith.constant 121 : i32
    %26 = tpu.dynamic_rotate %20 by %c121_i32 dim 1 : vector<8x128xf32>, i32 -> vector<8x128xf32>
    %c120_i32 = arith.constant 120 : i32
    %27 = tpu.dynamic_rotate %20 by %c120_i32 dim 1 : vector<8x128xf32>, i32 -> vector<8x128xf32>
    %c119_i32 = arith.constant 119 : i32
    %28 = tpu.dynamic_rotate %20 by %c119_i32 dim 1 : vector<8x128xf32>, i32 -> vector<8x128xf32>
    %29 = tpu.concatenate %21, %22, %23, %24, %20, %25, %26, %27, %28 in 0 : vector<8x128xf32>, vector<8x128xf32>, vector<8x128xf32>, vector<8x128xf32>, vector<8x128xf32>, vector<8x128xf32>, vector<8x128xf32>, vector<8x128xf32>, vector<8x128xf32> -> vector<72x128xf32>
    %c0_12 = arith.constant 0 : index
    %c0_13 = arith.constant 0 : index
    %30 = vector.load %arg7[%c0_12, %c0_13] : memref<72x128xf32, #tpu.memory_space<vmem>>, vector<72x128xf32>
    %31 = arith.mulf %29, %30 : vector<72x128xf32>
    %c0_14 = arith.constant 0 : index
    %c0_15 = arith.constant 0 : index
    %32 = vector.load %arg5[%c0_14, %c0_15] : memref<16x72xf32, #tpu.memory_space<vmem>>, vector<16x72xf32>
    %cst_16 = arith.constant dense<0.000000e+00> : vector<16x128xf32>
    %33 = tpu.matmul %32, %31, %cst_16 {dimension_numbers = #tpu.dot_dimension_numbers<[1], [0], [0], [1], [0, 0, 1, 1], [], []>} : vector<16x72xf32>, vector<72x128xf32>, vector<16x128xf32> -> vector<16x128xf32>
    %c0_17 = arith.constant 0 : index
    %c0_18 = arith.constant 0 : index
    %34 = vector.load %arg6[%c0_17, %c0_18] : memref<16x1xf32, #tpu.memory_space<vmem>>, vector<16x1xf32>
    %35 = vector.broadcast %34 : vector<16x1xf32> to vector<16x128xf32>
    %36 = arith.addf %33, %35 : vector<16x128xf32>
    %cst_19 = arith.constant 0.000000e+00 : f32
    %37 = vector.broadcast %cst_19 : f32 to vector<16x128xf32>
    %38 = arith.maximumf %36, %37 : vector<16x128xf32>
    %c0_20 = arith.constant 0 : index
    %c0_21 = arith.constant 0 : index
    %39 = vector.load %arg8[%c0_20, %c0_21] : memref<128x32xf32, #tpu.memory_space<vmem>>, vector<128x32xf32>
    %cst_22 = arith.constant dense<0.000000e+00> : vector<16x32xf32>
    %40 = tpu.matmul %38, %39, %cst_22 {dimension_numbers = #tpu.dot_dimension_numbers<[1], [0], [0], [1], [0, 0, 1, 1], [], []>} : vector<16x128xf32>, vector<128x32xf32>, vector<16x32xf32> -> vector<16x32xf32>
    %c0_23 = arith.constant 0 : index
    %c0_24 = arith.constant 0 : index
    %41 = vector.load %arg9[%c0_23, %c0_24] : memref<32x512xf32, #tpu.memory_space<vmem>>, vector<32x512xf32>
    %cst_25 = arith.constant dense<0.000000e+00> : vector<16x512xf32>
    %42 = tpu.matmul %40, %41, %cst_25 {dimension_numbers = #tpu.dot_dimension_numbers<[1], [0], [0], [1], [0, 0, 1, 1], [], []>} : vector<16x32xf32>, vector<32x512xf32>, vector<16x512xf32> -> vector<16x512xf32>
    %c0_26 = arith.constant 0 : index
    %c0_27 = arith.constant 0 : index
    %43 = vector.load %arg10[%c0_26, %c0_27] : memref<16x512xf32, #tpu.memory_space<vmem>>, vector<16x512xf32>
    %44 = arith.mulf %42, %43 : vector<16x512xf32>
    %cst_28 = arith.constant 1.000000e+00 : f32
    %45 = vector.broadcast %cst_28 : f32 to vector<1x16xf32>
    %cst_29 = arith.constant dense<0.000000e+00> : vector<1x512xf32>
    %46 = tpu.matmul %45, %44, %cst_29 {dimension_numbers = #tpu.dot_dimension_numbers<[1], [0], [0], [1], [0, 0, 1, 1], [], []>} : vector<1x16xf32>, vector<16x512xf32>, vector<1x512xf32> -> vector<1x512xf32>
    %c0_30 = arith.constant 0 : index
    %c0_31 = arith.constant 0 : index
    %47 = vector.load %arg11[%c0_30, %c0_31] : memref<512x20xf32, #tpu.memory_space<vmem>>, vector<512x20xf32>
    %cst_32 = arith.constant dense<0.000000e+00> : vector<1x20xf32>
    %48 = tpu.matmul %46, %47, %cst_32 {dimension_numbers = #tpu.dot_dimension_numbers<[1], [0], [0], [1], [0, 0, 1, 1], [], []>} : vector<1x512xf32>, vector<512x20xf32>, vector<1x20xf32> -> vector<1x20xf32>
    %c0_33 = arith.constant 0 : index
    %c0_34 = arith.constant 0 : index
    %49 = vector.load %arg12[%c0_33, %c0_34] : memref<1x20xf32, #tpu.memory_space<vmem>>, vector<1x20xf32>
    %50 = arith.addf %48, %49 : vector<1x20xf32>
    %c0_35 = arith.constant 0 : index
    %c0_36 = arith.constant 0 : index
    %51 = vector.load %arg13[%c0_35, %c0_36] : memref<8x512xf32, #tpu.memory_space<vmem>>, vector<8x512xf32>
    tpu.vector_store %arg13[%c0_35, %c0_36], %18 {strides = array<i32>} : memref<8x512xf32, #tpu.memory_space<vmem>>, vector<8x512xf32>,
    %c0_37 = arith.constant 0 : index
    %c0_38 = arith.constant 0 : index
    %52 = vector.load %arg14[%c0_37, %c0_38] : memref<1x512xf32, #tpu.memory_space<vmem>>, vector<1x512xf32>
    tpu.vector_store %arg14[%c0_37, %c0_38], %46 {strides = array<i32>} : memref<1x512xf32, #tpu.memory_space<vmem>>, vector<1x512xf32>,
    %c0_39 = arith.constant 0 : index
    %c0_40 = arith.constant 0 : index
    %53 = vector.load %arg15[%c0_39, %c0_40] : memref<1x20xf32, #tpu.memory_space<vmem>>, vector<1x20xf32>
    tpu.vector_store %arg15[%c0_39, %c0_40], %50 {strides = array<i32>} : memref<1x20xf32, #tpu.memory_space<vmem>>, vector<1x20xf32>,
    return
  }
}

</mosaic_0001>

<llo_original>
// kernel: forward.1
$region0: #{forward.1}
  #allocation0 [shape = 'u32[]', space=smem, size = 0x4, offset = 0x4, fixed_abs, tag = 'smem constant byte address 0x4 - core index']
  #allocation1 [shape = 'u32[144,128]{1,0:T(1,128)}', space=vmem, size = 0x12000, scoped, tag = 'internal scratch']
  %s0 = inlined_call_operand.vmem [shape: f32[8,512], index: 0, kind: input, shape index: {}]
  %s1 = inlined_call_operand.vmem [shape: f32[8,72], index: 1, kind: input, shape index: {}]
  %s2 = inlined_call_operand.hbm [shape: f32[8,1], index: 2, kind: input, shape index: {}]
  %s3 = inlined_call_operand.vmem [shape: f32[72,512], index: 3, kind: input, shape index: {}]
  %s4 = inlined_call_operand.hbm [shape: f32[512,128], index: 4, kind: input, shape index: {}]
  %s5 = inlined_call_operand.hbm [shape: f32[16,72], index: 5, kind: input, shape index: {}]
  %s6 = inlined_call_operand.hbm [shape: f32[16,1], index: 6, kind: input, shape index: {}]
  %s7 = inlined_call_operand.vmem [shape: f32[72,128], index: 7, kind: input, shape index: {}]
  %s8 = inlined_call_operand.vmem [shape: f32[128,32], index: 8, kind: input, shape index: {}]
  %s9 = inlined_call_operand.hbm [shape: f32[32,512], index: 9, kind: input, shape index: {}]
  %s10 = inlined_call_operand.hbm [shape: f32[16,512], index: 10, kind: input, shape index: {}]
  %s11 = inlined_call_operand.hbm [shape: f32[512,20], index: 11, kind: input, shape index: {}]
  %s12 = inlined_call_operand.vmem [shape: f32[1,20], index: 12, kind: input, shape index: {}]
  %s13 = inlined_call_operand.vmem [shape: f32[8,512], index: 13, kind: output, shape index: {0}]
  %s14 = inlined_call_operand.vmem [shape: f32[1,512], index: 14, kind: output, shape index: {1}]
  %s15 = inlined_call_operand.vmem [shape: f32[1,20], index: 15, kind: output, shape index: {2}]
  %16 = xla_tuple %s13, %s14, %s15
  %s17 = sld [smem:[#allocation0]]
  $region106: #{forward.1} parent=0
    _
  %s19 = ssub.s32 1, %s17
  %s20 = scalar_select 0, %s19, %s17
  $region1: #{forward.1} parent=0
    #allocation2 [shape = 'u8[4096]{0}', space=vmem, size = 0x1000, scoped, tag = 'input window, operand 2, single buffered']
    #allocation3 [shape = 's32[1]{0}', space=sflag, size = 0x4, scoped, tag = 'scoped memory for forward.1']
    #allocation4 [shape = 'u8[262144]{0}', space=vmem, size = 0x40000, scoped, tag = 'input window, operand 4, single buffered']
    #allocation5 [shape = 's32[1]{0}', space=sflag, size = 0x4, scoped, tag = 'scoped memory for forward.1']
    #allocation6 [shape = 'u8[8192]{0}', space=vmem, size = 0x2000, scoped, tag = 'input window, operand 5, single buffered']
    #allocation7 [shape = 'u8[8192]{0}', space=vmem, size = 0x2000, scoped, tag = 'input window, operand 6, single buffered']
    #allocation8 [shape = 's32[1]{0}', space=sflag, size = 0x4, scoped, tag = 'scoped memory for forward.1']
    #allocation9 [shape = 'u8[65536]{0}', space=vmem, size = 0x10000, scoped, tag = 'input window, operand 9, single buffered']
    #allocation10 [shape = 'u8[32768]{0}', space=vmem, size = 0x8000, scoped, tag = 'input window, operand 10, single buffered']
    #allocation11 [shape = 's32[1]{0}', space=sflag, size = 0x4, scoped, tag = 'scoped memory for forward.1']
    #allocation12 [shape = 'u8[262144]{0}', space=vmem, size = 0x40000, scoped, tag = 'input window, operand 11, single buffered']
    %21 = vsyncpa [#allocation3], 0
    %22 = vsyncpa [#allocation5], 0
    %23 = vsyncpa [#allocation8], 0
    %24 = vsyncpa [#allocation11], 0
    // Predicated region
    $region2: #{forward.1} parent=1 // pred_check
      _
    $region3: #{forward.1} parent=1 // pred_check_branch
      %26 = sbr.rel (0) target = $region5
    $region4: #{forward.1} parent=1 // pred_region
      _
    $region5: #{forward.1} parent=1 // pred_fallthru
      _
    // Predicated region
    $region6: #{forward.1} parent=1 // pred_check
      _
    $region7: #{forward.1} parent=1 // pred_check_branch
      %28 = sbr.rel (0) target = $region9
    $region8: #{forward.1} parent=1 // pred_region
      _
    $region9: #{forward.1} parent=1 // pred_fallthru
      _
    // Predicated region
    $region10: #{forward.1} parent=1 // pred_check
      _
    $region11: #{forward.1} parent=1 // pred_check_branch
      %30 = sbr.rel (0) target = $region13
    $region12: #{forward.1} parent=1 // pred_region
      %s32 = ssub.s32 128, 128
      %33 = vsyncadd [#allocation3], %s32
      %s35 = sshll.u32 [#allocation2], 4
      %s36 = int_to_ptr.vmem [resolvable:$true] %s35
      %38 = dma.hbm_to_vmem [thread:$0]  %s2, 128, %s36, [#allocation3]
    $region13: #{forward.1} parent=1 // pred_fallthru
      _
    // Predicated region
    $region14: #{forward.1} parent=1 // pred_check
      _
    $region15: #{forward.1} parent=1 // pred_check_branch
      %40 = sbr.rel (0) target = $region17
    $region16: #{forward.1} parent=1 // pred_region
      _
    $region17: #{forward.1} parent=1 // pred_fallthru
      _
    // Predicated region
    $region18: #{forward.1} parent=1 // pred_check
      _
    $region19: #{forward.1} parent=1 // pred_check_branch
      %42 = sbr.rel (0) target = $region21
    $region20: #{forward.1} parent=1 // pred_region
      %s44 = ssub.s32 8192, 8192
      %45 = vsyncadd [#allocation5], %s44
      %s46 = sshll.u32 [#allocation4], 4
      %s47 = int_to_ptr.vmem [resolvable:$true] %s46
      %52 = dma.hbm_to_vmem [thread:$0]  %s4, 8192, %s47, [#allocation5], 128, 128, 8
    $region21: #{forward.1} parent=1 // pred_fallthru
      _
    // Predicated region
    $region22: #{forward.1} parent=1 // pred_check
      _
    $region23: #{forward.1} parent=1 // pred_check_branch
      %54 = sbr.rel (0) target = $region25
    $region24: #{forward.1} parent=1 // pred_region
      %s56 = ssub.s32 256, 256
      %57 = vsyncadd [#allocation5], %s56
      %s58 = sshll.u32 [#allocation6], 4
      %s59 = int_to_ptr.vmem [resolvable:$true] %s58
      %64 = dma.hbm_to_vmem [thread:$0]  %s5, 256, %s59, [#allocation5], 128, 128, 8
    $region25: #{forward.1} parent=1 // pred_fallthru
      _
    // Predicated region
    $region26: #{forward.1} parent=1 // pred_check
      _
    $region27: #{forward.1} parent=1 // pred_check_branch
      %66 = sbr.rel (0) target = $region29
    $region28: #{forward.1} parent=1 // pred_region
      %s68 = ssub.s32 256, 256
      %69 = vsyncadd [#allocation8], %s68
      %s70 = sshll.u32 [#allocation7], 4
      %s71 = int_to_ptr.vmem [resolvable:$true] %s70
      %76 = dma.hbm_to_vmem [thread:$0]  %s6, 256, %s71, [#allocation8], 128, 128, 8
    $region29: #{forward.1} parent=1 // pred_fallthru
      _
    // Predicated region
    $region30: #{forward.1} parent=1 // pred_check
      _
    $region31: #{forward.1} parent=1 // pred_check_branch
      %78 = sbr.rel (0) target = $region33
    $region32: #{forward.1} parent=1 // pred_region
      _
    $region33: #{forward.1} parent=1 // pred_fallthru
      _
    // Predicated region
    $region34: #{forward.1} parent=1 // pred_check
      _
    $region35: #{forward.1} parent=1 // pred_check_branch
      %80 = sbr.rel (0) target = $region37
    $region36: #{forward.1} parent=1 // pred_region
      _
    $region37: #{forward.1} parent=1 // pred_fallthru
      _
    // Predicated region
    $region38: #{forward.1} parent=1 // pred_check
      _
    $region39: #{forward.1} parent=1 // pred_check_branch
      %82 = sbr.rel (0) target = $region41
    $region40: #{forward.1} parent=1 // pred_region
      %s84 = ssub.s32 2048, 2048
      %85 = vsyncadd [#allocation8], %s84
      %s86 = sshll.u32 [#allocation9], 4
      %s87 = int_to_ptr.vmem [resolvable:$true] %s86
      %92 = dma.hbm_to_vmem [thread:$0]  %s9, 2048, %s87, [#allocation8], 512, 512, 32
    $region41: #{forward.1} parent=1 // pred_fallthru
      _
    // Predicated region
    $region42: #{forward.1} parent=1 // pred_check
      _
    $region43: #{forward.1} parent=1 // pred_check_branch
      %94 = sbr.rel (0) target = $region45
    $region44: #{forward.1} parent=1 // pred_region
      %s96 = ssub.s32 1024, 1024
      %97 = vsyncadd [#allocation11], %s96
      %s98 = sshll.u32 [#allocation10], 4
      %s99 = int_to_ptr.vmem [resolvable:$true] %s98
      %104 = dma.hbm_to_vmem [thread:$0]  %s10, 1024, %s99, [#allocation11], 512, 512, 32
    $region45: #{forward.1} parent=1 // pred_fallthru
      _
    // Predicated region
    $region46: #{forward.1} parent=1 // pred_check
      _
    $region47: #{forward.1} parent=1 // pred_check_branch
      %106 = sbr.rel (0) target = $region49
    $region48: #{forward.1} parent=1 // pred_region
      %s108 = ssub.s32 8192, 8192
      %109 = vsyncadd [#allocation11], %s108
      %s110 = sshll.u32 [#allocation12], 4
      %s111 = int_to_ptr.vmem [resolvable:$true] %s110
      %116 = dma.hbm_to_vmem [thread:$0]  %s11, 8192, %s111, [#allocation11], 128, 128, 8
    $region49: #{forward.1} parent=1 // pred_fallthru
      _
    // Predicated region
    $region50: #{forward.1} parent=1 // pred_check
      _
    $region51: #{forward.1} parent=1 // pred_check_branch
      %118 = sbr.rel (0) target = $region53
    $region52: #{forward.1} parent=1 // pred_region
      _
    $region53: #{forward.1} parent=1 // pred_fallthru
      _
    // Predicated region
    $region54: #{forward.1} parent=1 // pred_check
      _
    $region55: #{forward.1} parent=1 // pred_check_branch
      %120 = sbr.rel (0) target = $region57
    $region56: #{forward.1} parent=1 // pred_region
      %121 = dma.done [#allocation3], 128
    $region57: #{forward.1} parent=1 // pred_fallthru
      _
    // Predicated region
    $region58: #{forward.1} parent=1 // pred_check
      _
    $region59: #{forward.1} parent=1 // pred_check_branch
      %123 = sbr.rel (0) target = $region61
    $region60: #{forward.1} parent=1 // pred_region
      %124 = dma.done [#allocation5], 8192
    $region61: #{forward.1} parent=1 // pred_fallthru
      _
    // Predicated region
    $region62: #{forward.1} parent=1 // pred_check
      _
    $region63: #{forward.1} parent=1 // pred_check_branch
      %126 = sbr.rel (0) target = $region65
    $region64: #{forward.1} parent=1 // pred_region
      %127 = dma.done [#allocation5], 256
    $region65: #{forward.1} parent=1 // pred_fallthru
      _
    // Predicated region
    $region66: #{forward.1} parent=1 // pred_check
      _
    $region67: #{forward.1} parent=1 // pred_check_branch
      %129 = sbr.rel (0) target = $region69
    $region68: #{forward.1} parent=1 // pred_region
      %130 = dma.done [#allocation8], 256
    $region69: #{forward.1} parent=1 // pred_fallthru
      _
    // Predicated region
    $region70: #{forward.1} parent=1 // pred_check
      _
    $region71: #{forward.1} parent=1 // pred_check_branch
      %132 = sbr.rel (0) target = $region73
    $region72: #{forward.1} parent=1 // pred_region
      %133 = dma.done [#allocation8], 2048
    $region73: #{forward.1} parent=1 // pred_fallthru
      _
    // Predicated region
    $region74: #{forward.1} parent=1 // pred_check
      _
    $region75: #{forward.1} parent=1 // pred_check_branch
      %135 = sbr.rel (0) target = $region77
    $region76: #{forward.1} parent=1 // pred_region
      %136 = dma.done [#allocation11], 1024
    $region77: #{forward.1} parent=1 // pred_fallthru
      _
    // Predicated region
    $region78: #{forward.1} parent=1 // pred_check
      _
    $region79: #{forward.1} parent=1 // pred_check_branch
      %138 = sbr.rel (0) target = $region81
    $region80: #{forward.1} parent=1 // pred_region
      %139 = dma.done [#allocation11], 8192
    $region81: #{forward.1} parent=1 // pred_fallthru
      _
    %v140 = vld [vmem:[%s0] sm:$0xff]
    %v141 = vld [vmem:[%s0 + $0x8] sm:$0xff]
    %v142 = vld [vmem:[%s0 + $0x10] sm:$0xff]
    %v143 = vld [vmem:[%s0 + $0x18] sm:$0xff]
    %144 = vrot.lane.b32.xlu0 %v140, 17
    %v145 = vpop.permute.xlu0 %144
    %146 = vrot.lane.b32.xlu0 %v141, 17
    %v147 = vpop.permute.xlu0 %146
    %148 = vrot.lane.b32.xlu0 %v142, 17
    %v149 = vpop.permute.xlu0 %148
    %150 = vrot.lane.b32.xlu0 %v143, 17
    %v151 = vpop.permute.xlu0 %150
    %v152 = vlaneseq
    %v153 = vand.u32 %v152, 127
    %vm154 = vcmp.lt.s32.totalorder %v153, 17
    %v155 = vsel %vm154, %v149, %v151
    %v156 = vsel %vm154, %v147, %v149
    %v157 = vsel %vm154, %v145, %v147
    %v158 = vsel %vm154, %v151, %v145
    %159 = vrot.lane.b32.xlu0 %v140, 16
    %v160 = vpop.permute.xlu0 %159
    %161 = vrot.lane.b32.xlu0 %v141, 16
    %v162 = vpop.permute.xlu0 %161
    %163 = vrot.lane.b32.xlu0 %v142, 16
    %v164 = vpop.permute.xlu0 %163
    %165 = vrot.lane.b32.xlu0 %v143, 16
    %v166 = vpop.permute.xlu0 %165
    %vm167 = vcmp.lt.s32.totalorder %v153, 16
    %v168 = vsel %vm167, %v164, %v166
    %v169 = vsel %vm167, %v162, %v164
    %v170 = vsel %vm167, %v160, %v162
    %v171 = vsel %vm167, %v166, %v160
    %172 = vrot.lane.b32.xlu0 %v140, 15
    %v173 = vpop.permute.xlu0 %172
    %174 = vrot.lane.b32.xlu0 %v141, 15
    %v175 = vpop.permute.xlu0 %174
    %176 = vrot.lane.b32.xlu0 %v142, 15
    %v177 = vpop.permute.xlu0 %176
    %178 = vrot.lane.b32.xlu0 %v143, 15
    %v179 = vpop.permute.xlu0 %178
    %vm180 = vcmp.lt.s32.totalorder %v153, 15
    %v181 = vsel %vm180, %v177, %v179
    %v182 = vsel %vm180, %v175, %v177
    %v183 = vsel %vm180, %v173, %v175
    %v184 = vsel %vm180, %v179, %v173
    %185 = vrot.lane.b32.xlu0 %v140, 1
    %v186 = vpop.permute.xlu0 %185
    %187 = vrot.lane.b32.xlu0 %v141, 1
    %v188 = vpop.permute.xlu0 %187
    %189 = vrot.lane.b32.xlu0 %v142, 1
    %v190 = vpop.permute.xlu0 %189
    %191 = vrot.lane.b32.xlu0 %v143, 1
    %v192 = vpop.permute.xlu0 %191
    %vm193 = vcmp.lt.s32.totalorder %v153, 1
    %v194 = vsel %vm193, %v190, %v192
    %v195 = vsel %vm193, %v188, %v190
    %v196 = vsel %vm193, %v186, %v188
    %v197 = vsel %vm193, %v192, %v186
    %198 = vrot.lane.b32.xlu0 %v140, 127
    %v199 = vpop.permute.xlu0 %198
    %200 = vrot.lane.b32.xlu0 %v141, 127
    %v201 = vpop.permute.xlu0 %200
    %202 = vrot.lane.b32.xlu0 %v142, 127
    %v203 = vpop.permute.xlu0 %202
    %204 = vrot.lane.b32.xlu0 %v143, 127
    %v205 = vpop.permute.xlu0 %204
    %vm206 = vcmp.lt.s32.totalorder %v153, 127
    %v207 = vsel %vm206, %v203, %v205
    %v208 = vsel %vm206, %v201, %v203
    %v209 = vsel %vm206, %v199, %v201
    %v210 = vsel %vm206, %v205, %v199
    %211 = vrot.lane.b32.xlu0 %v140, 113
    %v212 = vpop.permute.xlu0 %211
    %213 = vrot.lane.b32.xlu0 %v141, 113
    %v214 = vpop.permute.xlu0 %213
    %215 = vrot.lane.b32.xlu0 %v142, 113
    %v216 = vpop.permute.xlu0 %215
    %217 = vrot.lane.b32.xlu0 %v143, 113
    %v218 = vpop.permute.xlu0 %217
    %vm219 = vcmp.lt.s32.totalorder %v153, 113
    %v220 = vsel %vm219, %v216, %v218
    %v221 = vsel %vm219, %v214, %v216
    %v222 = vsel %vm219, %v212, %v214
    %v223 = vsel %vm219, %v218, %v212
    %224 = vrot.lane.b32.xlu0 %v140, 112
    %v225 = vpop.permute.xlu0 %224
    %226 = vrot.lane.b32.xlu0 %v141, 112
    %v227 = vpop.permute.xlu0 %226
    %228 = vrot.lane.b32.xlu0 %v142, 112
    %v229 = vpop.permute.xlu0 %228
    %230 = vrot.lane.b32.xlu0 %v143, 112
    %v231 = vpop.permute.xlu0 %230
    %vm232 = vcmp.lt.s32.totalorder %v153, 112
    %v233 = vsel %vm232, %v229, %v231
    %v234 = vsel %vm232, %v227, %v229
    %v235 = vsel %vm232, %v225, %v227
    %v236 = vsel %vm232, %v231, %v225
    %237 = vrot.lane.b32.xlu0 %v140, 111
    %v238 = vpop.permute.xlu0 %237
    %239 = vrot.lane.b32.xlu0 %v141, 111
    %v240 = vpop.permute.xlu0 %239
    %241 = vrot.lane.b32.xlu0 %v142, 111
    %v242 = vpop.permute.xlu0 %241
    %243 = vrot.lane.b32.xlu0 %v143, 111
    %v244 = vpop.permute.xlu0 %243
    %vm245 = vcmp.lt.s32.totalorder %v153, 111
    %v246 = vsel %vm245, %v242, %v244
    %v247 = vsel %vm245, %v240, %v242
    %v248 = vsel %vm245, %v238, %v240
    %v249 = vsel %vm245, %v244, %v238
    %v250 = vld [vmem:[%s3] sm:$0xff]
    %v251 = vld [vmem:[%s3 + $0x8] sm:$0xff]
    %v252 = vld [vmem:[%s3 + $0x10] sm:$0xff]
    %v253 = vld [vmem:[%s3 + $0x18] sm:$0xff]
    %v254 = vld [vmem:[%s3 + $0x20] sm:$0xff]
    %v255 = vld [vmem:[%s3 + $0x28] sm:$0xff]
    %v256 = vld [vmem:[%s3 + $0x30] sm:$0xff]
    %v257 = vld [vmem:[%s3 + $0x38] sm:$0xff]
    %v258 = vld [vmem:[%s3 + $0x40] sm:$0xff]
    %v259 = vld [vmem:[%s3 + $0x48] sm:$0xff]
    %v260 = vld [vmem:[%s3 + $0x50] sm:$0xff]
    %v261 = vld [vmem:[%s3 + $0x58] sm:$0xff]
    %v262 = vld [vmem:[%s3 + $0x60] sm:$0xff]
    %v263 = vld [vmem:[%s3 + $0x68] sm:$0xff]
    %v264 = vld [vmem:[%s3 + $0x70] sm:$0xff]
    %v265 = vld [vmem:[%s3 + $0x78] sm:$0xff]
    %v266 = vld [vmem:[%s3 + $0x80] sm:$0xff]
    %v267 = vld [vmem:[%s3 + $0x88] sm:$0xff]
    %v268 = vld [vmem:[%s3 + $0x90] sm:$0xff]
    %v269 = vld [vmem:[%s3 + $0x98] sm:$0xff]
    %v270 = vld [vmem:[%s3 + $0xa0] sm:$0xff]
    %v271 = vld [vmem:[%s3 + $0xa8] sm:$0xff]
    %v272 = vld [vmem:[%s3 + $0xb0] sm:$0xff]
    %v273 = vld [vmem:[%s3 + $0xb8] sm:$0xff]
    %v274 = vld [vmem:[%s3 + $0xc0] sm:$0xff]
    %v275 = vld [vmem:[%s3 + $0xc8] sm:$0xff]
    %v276 = vld [vmem:[%s3 + $0xd0] sm:$0xff]
    %v277 = vld [vmem:[%s3 + $0xd8] sm:$0xff]
    %v278 = vld [vmem:[%s3 + $0xe0] sm:$0xff]
    %v279 = vld [vmem:[%s3 + $0xe8] sm:$0xff]
    %v280 = vld [vmem:[%s3 + $0xf0] sm:$0xff]
    %v281 = vld [vmem:[%s3 + $0xf8] sm:$0xff]
    %v282 = vld [vmem:[%s3 + $0x100] sm:$0xff]
    %v283 = vld [vmem:[%s3 + $0x108] sm:$0xff]
    %v284 = vld [vmem:[%s3 + $0x110] sm:$0xff]
    %v285 = vld [vmem:[%s3 + $0x118] sm:$0xff]
    %v286 = vmul.f32 %v158, %v250
    %v287 = vmul.f32 %v157, %v251
    %v288 = vmul.f32 %v156, %v252
    %v289 = vmul.f32 %v155, %v253
    %v290 = vmul.f32 %v171, %v254
    %v291 = vmul.f32 %v170, %v255
    %v292 = vmul.f32 %v169, %v256
    %v293 = vmul.f32 %v168, %v257
    %v294 = vmul.f32 %v184, %v258
    %v295 = vmul.f32 %v183, %v259
    %v296 = vmul.f32 %v182, %v260
    %v297 = vmul.f32 %v181, %v261
    %v298 = vmul.f32 %v197, %v262
    %v299 = vmul.f32 %v196, %v263
    %v300 = vmul.f32 %v195, %v264
    %v301 = vmul.f32 %v194, %v265
    %v302 = vmul.f32 %v140, %v266
    %v303 = vmul.f32 %v141, %v267
    %v304 = vmul.f32 %v142, %v268
    %v305 = vmul.f32 %v143, %v269
    %v306 = vmul.f32 %v209, %v270
    %v307 = vmul.f32 %v208, %v271
    %v308 = vmul.f32 %v207, %v272
    %v309 = vmul.f32 %v210, %v273
    %v310 = vmul.f32 %v222, %v274
    %v311 = vmul.f32 %v221, %v275
    %v312 = vmul.f32 %v220, %v276
    %v313 = vmul.f32 %v223, %v277
    %v314 = vmul.f32 %v235, %v278
    %v315 = vmul.f32 %v234, %v279
    %v316 = vmul.f32 %v233, %v280
    %v317 = vmul.f32 %v236, %v281
    %v318 = vmul.f32 %v248, %v282
    %v319 = vmul.f32 %v247, %v283
    %v320 = vmul.f32 %v246, %v284
    %v321 = vmul.f32 %v249, %v285
    %v322 = vld [vmem:[%s1] sm:$0xff]
    %v323 = vld [vmem:[#allocation2] sm:$0xff]
    %325 = vset.pattern.permute.xlu0 0
    %326 = vperm.xlu0 %325, %v323
    %v327 = vpop.permute.xlu0 %326
    %vm329 = vcmask 588800
    %v331 = vsel %vm329, %v322, 0
    %333 = vmatprep.subr.mxu0 %v287
    %334 = vmatpush1.msra.mxu0 %v286
    %335 = vmatprep.subr.mxu0 %v291
    %336 = vmatpush1.msra.mxu0 %v290
    %337 = vmatprep.subr.mxu0 %v295
    %338 = vmatpush1.msra.mxu0 %v294
    %339 = vmatprep.subr.mxu0 %v299
    %340 = vmatpush1.msra.mxu0 %v298
    %341 = vmatprep.subr.mxu0 %v303
    %342 = vmatpush1.msra.mxu0 %v302
    %343 = vmatprep.subr.mxu0 %v307
    %344 = vmatpush1.msra.mxu0 %v306
    %345 = vmatprep.subr.mxu0 %v311
    %346 = vmatpush1.msra.mxu0 %v310
    %347 = vmatprep.subr.mxu0 %v315
    %348 = vmatpush1.msra.mxu0 %v314
    %349 = vmatprep.subr.mxu0 %v319
    %350 = vmatpush1.msra.mxu0 %v318
    %351 = vmatprep.subr.mxu0 0.0
    %352 = vmatpush1.msra.mxu0 0.0
    %353 = vmatprep.subr.mxu0 0.0
    %354 = vmatpush1.msra.mxu0 0.0
    %355 = vmatprep.subr.mxu0 0.0
    %356 = vmatpush1.msra.mxu0 0.0
    %357 = vmatprep.subr.mxu0 0.0
    %358 = vmatpush1.msra.mxu0 0.0
    %359 = vmatprep.subr.mxu0 0.0
    %360 = vmatpush1.msra.mxu0 0.0
    %361 = vmatprep.subr.mxu0 0.0
    %362 = vmatpush1.msra.mxu0 0.0
    %363 = vmatprep.subr.mxu0 0.0
    %364 = vmatpush1.msra.mxu0 0.0
    %365 = vmatprep.subr.mxu0 0.0
    %366 = vmatpush1.msra.mxu0 0.0
    %367 = vmatprep.subr.mxu0 0.0
    %368 = vmatpush1.msra.mxu0 0.0
    %369 = vmatprep.subr.mxu0 0.0
    %370 = vmatpush1.msra.mxu0 0.0
    %371 = vmatprep.subr.mxu0 0.0
    %372 = vmatpush1.msra.mxu0 0.0
    %373 = vmatprep.subr.mxu0 0.0
    %374 = vmatpush1.msra.mxu0 0.0
    %375 = vmatprep.subr.mxu0 0.0
    %376 = vmatpush1.msra.mxu0 0.0
    %377 = vmatprep.subr.mxu0 0.0
    %378 = vmatpush1.msra.mxu0 0.0
    %379 = vmatprep.subr.mxu0 0.0
    %380 = vmatpush1.msra.mxu0 0.0
    %381 = vmatprep.subr.mxu0 0.0
    %382 = vmatpush1.msra.mxu0 0.0
    %383 = vmatprep.subr.mxu0 0.0
    %384 = vmatpush1.msra.mxu0 0.0
    %385 = vmatprep.subr.mxu0 0.0
    %386 = vmatpush1.msra.mxu0 0.0
    %387 = vmatprep.subr.mxu0 0.0
    %388 = vmatpush1.msra.mxu0 0.0
    %389 = vmatprep.subr.mxu0 0.0
    %390 = vmatpush1.msra.mxu0 0.0
    %391 = vmatprep.subr.mxu0 0.0
    %392 = vmatpush1.msra.mxu0 0.0
    %393 = vmatprep.subr.mxu0 0.0
    %394 = vmatpush1.msra.mxu0 0.0
    %395 = vmatprep.subr.mxu0 0.0
    %396 = vmatpush1.msra.mxu0 0.0
    %397 = vmatprep.mubr.f32.mxu0 0.0
    %398 = vmatmul.mubr.f32.gmra.mrb[0].mxu0 %v331
    %v399 = vpop.f32.mrb[0].mxu0
    %v400 = vadd.f32 %v327, %v399
    %v401 = vpop.f32.mrb[0].mxu0
    %v402 = vadd.f32 %v327, %v401
    %403 = vdwg.mxu0
    %404 = vmatprep.subr.mxu0 %v289
    %405 = vmatpush1.msra.mxu0 %v288
    %406 = vmatprep.subr.mxu0 %v293
    %407 = vmatpush1.msra.mxu0 %v292
    %408 = vmatprep.subr.mxu0 %v297
    %409 = vmatpush1.msra.mxu0 %v296
    %410 = vmatprep.subr.mxu0 %v301
    %411 = vmatpush1.msra.mxu0 %v300
    %412 = vmatprep.subr.mxu0 %v305
    %413 = vmatpush1.msra.mxu0 %v304
    %414 = vmatprep.subr.mxu0 %v309
    %415 = vmatpush1.msra.mxu0 %v308
    %416 = vmatprep.subr.mxu0 %v313
    %417 = vmatpush1.msra.mxu0 %v312
    %418 = vmatprep.subr.mxu0 %v317
    %419 = vmatpush1.msra.mxu0 %v316
    %420 = vmatprep.subr.mxu0 %v321
    %421 = vmatpush1.msra.mxu0 %v320
    %422 = vmatprep.subr.mxu0 0.0
    %423 = vmatpush1.msra.mxu0 0.0
    %424 = vmatprep.subr.mxu0 0.0
    %425 = vmatpush1.msra.mxu0 0.0
    %426 = vmatprep.subr.mxu0 0.0
    %427 = vmatpush1.msra.mxu0 0.0
    %428 = vmatprep.subr.mxu0 0.0
    %429 = vmatpush1.msra.mxu0 0.0
    %430 = vmatprep.subr.mxu0 0.0
    %431 = vmatpush1.msra.mxu0 0.0
    %432 = vmatprep.subr.mxu0 0.0
    %433 = vmatpush1.msra.mxu0 0.0
    %434 = vmatprep.subr.mxu0 0.0
    %435 = vmatpush1.msra.mxu0 0.0
    %436 = vmatprep.subr.mxu0 0.0
    %437 = vmatpush1.msra.mxu0 0.0
    %438 = vmatprep.subr.mxu0 0.0
    %439 = vmatpush1.msra.mxu0 0.0
    %440 = vmatprep.subr.mxu0 0.0
    %441 = vmatpush1.msra.mxu0 0.0
    %442 = vmatprep.subr.mxu0 0.0
    %443 = vmatpush1.msra.mxu0 0.0
    %444 = vmatprep.subr.mxu0 0.0
    %445 = vmatpush1.msra.mxu0 0.0
    %446 = vmatprep.subr.mxu0 0.0
    %447 = vmatpush1.msra.mxu0 0.0
    %448 = vmatprep.subr.mxu0 0.0
    %449 = vmatpush1.msra.mxu0 0.0
    %450 = vmatprep.subr.mxu0 0.0
    %451 = vmatpush1.msra.mxu0 0.0
    %452 = vmatprep.subr.mxu0 0.0
    %453 = vmatpush1.msra.mxu0 0.0
    %454 = vmatprep.subr.mxu0 0.0
    %455 = vmatpush1.msra.mxu0 0.0
    %456 = vmatprep.subr.mxu0 0.0
    %457 = vmatpush1.msra.mxu0 0.0
    %458 = vmatprep.subr.mxu0 0.0
    %459 = vmatpush1.msra.mxu0 0.0
    %460 = vmatprep.subr.mxu0 0.0
    %461 = vmatpush1.msra.mxu0 0.0
    %462 = vmatprep.subr.mxu0 0.0
    %463 = vmatpush1.msra.mxu0 0.0
    %464 = vmatprep.subr.mxu0 0.0
    %465 = vmatpush1.msra.mxu0 0.0
    %466 = vmatprep.subr.mxu0 0.0
    %467 = vmatpush1.msra.mxu0 0.0
    %468 = vmatprep.mubr.f32.mxu0 0.0
    %469 = vmatmul.mubr.f32.gmra.mrb[0].mxu0 %v331
    %v470 = vpop.f32.mrb[0].mxu0
    %v471 = vadd.f32 %v327, %v470
    %v472 = vpop.f32.mrb[0].mxu0
    %v473 = vadd.f32 %v327, %v472
    %474 = vdwg.mxu0
    %v475 = vmax.f32 %v400, 0.0
    %v476 = vmax.f32 %v402, 0.0
    %v477 = vmax.f32 %v471, 0.0
    %v478 = vmax.f32 %v473, 0.0
    %v479 = vld [vmem:[#allocation4] sm:$0xff]
    %v480 = vld [vmem:[#allocation4 + $0x8] sm:$0xff]
    %v481 = vld [vmem:[#allocation4 + $0x10] sm:$0xff]
    %v482 = vld [vmem:[#allocation4 + $0x18] sm:$0xff]
    %v483 = vld [vmem:[#allocation4 + $0x20] sm:$0xff]
    %v484 = vld [vmem:[#allocation4 + $0x28] sm:$0xff]
    %v485 = vld [vmem:[#allocation4 + $0x30] sm:$0xff]
    %v486 = vld [vmem:[#allocation4 + $0x38] sm:$0xff]
    %v487 = vld [vmem:[#allocation4 + $0x40] sm:$0xff]
    %v488 = vld [vmem:[#allocation4 + $0x48] sm:$0xff]
    %v489 = vld [vmem:[#allocation4 + $0x50] sm:$0xff]
    %v490 = vld [vmem:[#allocation4 + $0x58] sm:$0xff]
    %v491 = vld [vmem:[#allocation4 + $0x60] sm:$0xff]
    %v492 = vld [vmem:[#allocation4 + $0x68] sm:$0xff]
    %v493 = vld [vmem:[#allocation4 + $0x70] sm:$0xff]
    %v494 = vld [vmem:[#allocation4 + $0x78] sm:$0xff]
    %v495 = vld [vmem:[#allocation4 + $0x80] sm:$0xff]
    %v496 = vld [vmem:[#allocation4 + $0x88] sm:$0xff]
    %v497 = vld [vmem:[#allocation4 + $0x90] sm:$0xff]
    %v498 = vld [vmem:[#allocation4 + $0x98] sm:$0xff]
    %v499 = vld [vmem:[#allocation4 + $0xa0] sm:$0xff]
    %v500 = vld [vmem:[#allocation4 + $0xa8] sm:$0xff]
    %v501 = vld [vmem:[#allocation4 + $0xb0] sm:$0xff]
    %v502 = vld [vmem:[#allocation4 + $0xb8] sm:$0xff]
    %v503 = vld [vmem:[#allocation4 + $0xc0] sm:$0xff]
    %v504 = vld [vmem:[#allocation4 + $0xc8] sm:$0xff]
    %v505 = vld [vmem:[#allocation4 + $0xd0] sm:$0xff]
    %v506 = vld [vmem:[#allocation4 + $0xd8] sm:$0xff]
    %v507 = vld [vmem:[#allocation4 + $0xe0] sm:$0xff]
    %v508 = vld [vmem:[#allocation4 + $0xe8] sm:$0xff]
    %v509 = vld [vmem:[#allocation4 + $0xf0] sm:$0xff]
    %v510 = vld [vmem:[#allocation4 + $0xf8] sm:$0xff]
    %v511 = vld [vmem:[#allocation4 + $0x100] sm:$0xff]
    %v512 = vld [vmem:[#allocation4 + $0x108] sm:$0xff]
    %v513 = vld [vmem:[#allocation4 + $0x110] sm:$0xff]
    %v514 = vld [vmem:[#allocation4 + $0x118] sm:$0xff]
    %v515 = vld [vmem:[#allocation4 + $0x120] sm:$0xff]
    %v516 = vld [vmem:[#allocation4 + $0x128] sm:$0xff]
    %v517 = vld [vmem:[#allocation4 + $0x130] sm:$0xff]
    %v518 = vld [vmem:[#allocation4 + $0x138] sm:$0xff]
    %v519 = vld [vmem:[#allocation4 + $0x140] sm:$0xff]
    %v520 = vld [vmem:[#allocation4 + $0x148] sm:$0xff]
    %v521 = vld [vmem:[#allocation4 + $0x150] sm:$0xff]
    %v522 = vld [vmem:[#allocation4 + $0x158] sm:$0xff]
    %v523 = vld [vmem:[#allocation4 + $0x160] sm:$0xff]
    %v524 = vld [vmem:[#allocation4 + $0x168] sm:$0xff]
    %v525 = vld [vmem:[#allocation4 + $0x170] sm:$0xff]
    %v526 = vld [vmem:[#allocation4 + $0x178] sm:$0xff]
    %v527 = vld [vmem:[#allocation4 + $0x180] sm:$0xff]
    %v528 = vld [vmem:[#allocation4 + $0x188] sm:$0xff]
    %v529 = vld [vmem:[#allocation4 + $0x190] sm:$0xff]
    %v530 = vld [vmem:[#allocation4 + $0x198] sm:$0xff]
    %v531 = vld [vmem:[#allocation4 + $0x1a0] sm:$0xff]
    %v532 = vld [vmem:[#allocation4 + $0x1a8] sm:$0xff]
    %v533 = vld [vmem:[#allocation4 + $0x1b0] sm:$0xff]
    %v534 = vld [vmem:[#allocation4 + $0x1b8] sm:$0xff]
    %v535 = vld [vmem:[#allocation4 + $0x1c0] sm:$0xff]
    %v536 = vld [vmem:[#allocation4 + $0x1c8] sm:$0xff]
    %v537 = vld [vmem:[#allocation4 + $0x1d0] sm:$0xff]
    %v538 = vld [vmem:[#allocation4 + $0x1d8] sm:$0xff]
    %v539 = vld [vmem:[#allocation4 + $0x1e0] sm:$0xff]
    %v540 = vld [vmem:[#allocation4 + $0x1e8] sm:$0xff]
    %v541 = vld [vmem:[#allocation4 + $0x1f0] sm:$0xff]
    %v542 = vld [vmem:[#allocation4 + $0x1f8] sm:$0xff]
    %543 = vmatprep.subr.mxu0 0.0
    %544 = vmatpush1.msra.mxu0 %v479
    %545 = vmatprep.subr.mxu0 0.0
    %546 = vmatpush1.msra.mxu0 %v480
    %547 = vmatprep.subr.mxu0 0.0
    %548 = vmatpush1.msra.mxu0 %v481
    %549 = vmatprep.subr.mxu0 0.0
    %550 = vmatpush1.msra.mxu0 %v482
    %551 = vmatprep.subr.mxu0 0.0
    %552 = vmatpush1.msra.mxu0 %v483
    %553 = vmatprep.subr.mxu0 0.0
    %554 = vmatpush1.msra.mxu0 %v484
    %555 = vmatprep.subr.mxu0 0.0
    %556 = vmatpush1.msra.mxu0 %v485
    %557 = vmatprep.subr.mxu0 0.0
    %558 = vmatpush1.msra.mxu0 %v486
    %559 = vmatprep.subr.mxu0 0.0
    %560 = vmatpush1.msra.mxu0 %v487
    %561 = vmatprep.subr.mxu0 0.0
    %562 = vmatpush1.msra.mxu0 %v488
    %563 = vmatprep.subr.mxu0 0.0
    %564 = vmatpush1.msra.mxu0 %v489
    %565 = vmatprep.subr.mxu0 0.0
    %566 = vmatpush1.msra.mxu0 %v490
    %567 = vmatprep.subr.mxu0 0.0
    %568 = vmatpush1.msra.mxu0 %v491
    %569 = vmatprep.subr.mxu0 0.0
    %570 = vmatpush1.msra.mxu0 %v492
    %571 = vmatprep.subr.mxu0 0.0
    %572 = vmatpush1.msra.mxu0 %v493
    %573 = vmatprep.subr.mxu0 0.0
    %574 = vmatpush1.msra.mxu0 %v494
    %575 = vmatprep.subr.mxu0 0.0
    %576 = vmatpush1.msra.mxu0 %v495
    %577 = vmatprep.subr.mxu0 0.0
    %578 = vmatpush1.msra.mxu0 %v496
    %579 = vmatprep.subr.mxu0 0.0
    %580 = vmatpush1.msra.mxu0 %v497
    %581 = vmatprep.subr.mxu0 0.0
    %582 = vmatpush1.msra.mxu0 %v498
    %583 = vmatprep.subr.mxu0 0.0
    %584 = vmatpush1.msra.mxu0 %v499
    %585 = vmatprep.subr.mxu0 0.0
    %586 = vmatpush1.msra.mxu0 %v500
    %587 = vmatprep.subr.mxu0 0.0
    %588 = vmatpush1.msra.mxu0 %v501
    %589 = vmatprep.subr.mxu0 0.0
    %590 = vmatpush1.msra.mxu0 %v502
    %591 = vmatprep.subr.mxu0 0.0
    %592 = vmatpush1.msra.mxu0 %v503
    %593 = vmatprep.subr.mxu0 0.0
    %594 = vmatpush1.msra.mxu0 %v504
    %595 = vmatprep.subr.mxu0 0.0
    %596 = vmatpush1.msra.mxu0 %v505
    %597 = vmatprep.subr.mxu0 0.0
    %598 = vmatpush1.msra.mxu0 %v506
    %599 = vmatprep.subr.mxu0 0.0
    %600 = vmatpush1.msra.mxu0 %v507
    %601 = vmatprep.subr.mxu0 0.0
    %602 = vmatpush1.msra.mxu0 %v508
    %603 = vmatprep.subr.mxu0 0.0
    %604 = vmatpush1.msra.mxu0 %v509
    %605 = vmatprep.subr.mxu0 0.0
    %606 = vmatpush1.msra.mxu0 %v510
    %607 = vmatprep.mubr.f32.mxu0 %v476
    %608 = vmatmul.mubr.f32.gmra.mrb[0].mxu0 %v475
    %v609 = vpop.f32.mrb[0].mxu0
    %v610 = vadd.f32 0.0, %v609
    %v611 = vpop.f32.mrb[0].mxu0
    %612 = vdwg.mxu0
    %613 = vmatprep.subr.mxu0 0.0
    %614 = vmatpush1.msra.mxu0 %v511
    %615 = vmatprep.subr.mxu0 0.0
    %616 = vmatpush1.msra.mxu0 %v512
    %617 = vmatprep.subr.mxu0 0.0
    %618 = vmatpush1.msra.mxu0 %v513
    %619 = vmatprep.subr.mxu0 0.0
    %620 = vmatpush1.msra.mxu0 %v514
    %621 = vmatprep.subr.mxu0 0.0
    %622 = vmatpush1.msra.mxu0 %v515
    %623 = vmatprep.subr.mxu0 0.0
    %624 = vmatpush1.msra.mxu0 %v516
    %625 = vmatprep.subr.mxu0 0.0
    %626 = vmatpush1.msra.mxu0 %v517
    %627 = vmatprep.subr.mxu0 0.0
    %628 = vmatpush1.msra.mxu0 %v518
    %629 = vmatprep.subr.mxu0 0.0
    %630 = vmatpush1.msra.mxu0 %v519
    %631 = vmatprep.subr.mxu0 0.0
    %632 = vmatpush1.msra.mxu0 %v520
    %633 = vmatprep.subr.mxu0 0.0
    %634 = vmatpush1.msra.mxu0 %v521
    %635 = vmatprep.subr.mxu0 0.0
    %636 = vmatpush1.msra.mxu0 %v522
    %637 = vmatprep.subr.mxu0 0.0
    %638 = vmatpush1.msra.mxu0 %v523
    %639 = vmatprep.subr.mxu0 0.0
    %640 = vmatpush1.msra.mxu0 %v524
    %641 = vmatprep.subr.mxu0 0.0
    %642 = vmatpush1.msra.mxu0 %v525
    %643 = vmatprep.subr.mxu0 0.0
    %644 = vmatpush1.msra.mxu0 %v526
    %645 = vmatprep.subr.mxu0 0.0
    %646 = vmatpush1.msra.mxu0 %v527
    %647 = vmatprep.subr.mxu0 0.0
    %648 = vmatpush1.msra.mxu0 %v528
    %649 = vmatprep.subr.mxu0 0.0
    %650 = vmatpush1.msra.mxu0 %v529
    %651 = vmatprep.subr.mxu0 0.0
    %652 = vmatpush1.msra.mxu0 %v530
    %653 = vmatprep.subr.mxu0 0.0
    %654 = vmatpush1.msra.mxu0 %v531
    %655 = vmatprep.subr.mxu0 0.0
    %656 = vmatpush1.msra.mxu0 %v532
    %657 = vmatprep.subr.mxu0 0.0
    %658 = vmatpush1.msra.mxu0 %v533
    %659 = vmatprep.subr.mxu0 0.0
    %660 = vmatpush1.msra.mxu0 %v534
    %661 = vmatprep.subr.mxu0 0.0
    %662 = vmatpush1.msra.mxu0 %v535
    %663 = vmatprep.subr.mxu0 0.0
    %664 = vmatpush1.msra.mxu0 %v536
    %665 = vmatprep.subr.mxu0 0.0
    %666 = vmatpush1.msra.mxu0 %v537
    %667 = vmatprep.subr.mxu0 0.0
    %668 = vmatpush1.msra.mxu0 %v538
    %669 = vmatprep.subr.mxu0 0.0
    %670 = vmatpush1.msra.mxu0 %v539
    %671 = vmatprep.subr.mxu0 0.0
    %672 = vmatpush1.msra.mxu0 %v540
    %673 = vmatprep.subr.mxu0 0.0
    %674 = vmatpush1.msra.mxu0 %v541
    %675 = vmatprep.subr.mxu0 0.0
    %676 = vmatpush1.msra.mxu0 %v542
    %677 = vmatprep.mubr.f32.mxu0 %v478
    %678 = vmatmul.mubr.f32.gmra.mrb[0].mxu0 %v477
    %v679 = vpop.f32.mrb[0].mxu0
    %v680 = vadd.f32 %v610, %v679
    %v681 = vpop.f32.mrb[0].mxu0
    %682 = vdwg.mxu0
    %683 = vrot.lane.b32.xlu0 %v680, 9
    %v684 = vpop.permute.xlu0 %683
    %685 = vrot.lane.b32.xlu0 %v680, 8
    %v686 = vpop.permute.xlu0 %685
    %687 = vrot.lane.b32.xlu0 %v680, 7
    %v688 = vpop.permute.xlu0 %687
    %689 = vrot.lane.b32.xlu0 %v680, 1
    %v690 = vpop.permute.xlu0 %689
    %691 = vrot.lane.b32.xlu0 %v680, 127
    %v692 = vpop.permute.xlu0 %691
    %693 = vrot.lane.b32.xlu0 %v680, 121
    %v694 = vpop.permute.xlu0 %693
    %695 = vrot.lane.b32.xlu0 %v680, 120
    %v696 = vpop.permute.xlu0 %695
    %697 = vrot.lane.b32.xlu0 %v680, 119
    %v698 = vpop.permute.xlu0 %697
    %v699 = vld [vmem:[%s7] sm:$0xff]
    %v700 = vld [vmem:[%s7 + $0x8] sm:$0xff]
    %v701 = vld [vmem:[%s7 + $0x10] sm:$0xff]
    %v702 = vld [vmem:[%s7 + $0x18] sm:$0xff]
    %v703 = vld [vmem:[%s7 + $0x20] sm:$0xff]
    %v704 = vld [vmem:[%s7 + $0x28] sm:$0xff]
    %v705 = vld [vmem:[%s7 + $0x30] sm:$0xff]
    %v706 = vld [vmem:[%s7 + $0x38] sm:$0xff]
    %v707 = vld [vmem:[%s7 + $0x40] sm:$0xff]
    %v708 = vmul.f32 %v684, %v699
    %v709 = vmul.f32 %v686, %v700
    %v710 = vmul.f32 %v688, %v701
    %v711 = vmul.f32 %v690, %v702
    %v712 = vmul.f32 %v680, %v703
    %v713 = vmul.f32 %v692, %v704
    %v714 = vmul.f32 %v694, %v705
    %v715 = vmul.f32 %v696, %v706
    %v716 = vmul.f32 %v698, %v707
    %v717 = vld [vmem:[#allocation6] sm:$0xff]
    %v718 = vld [vmem:[#allocation6 + $0x8] sm:$0xff]
    %v719 = vld [vmem:[#allocation7] sm:$0xff]
    %v720 = vld [vmem:[#allocation7 + $0x8] sm:$0xff]
    %722 = vset.pattern.permute.xlu0 0
    %723 = vperm.xlu0 %722, %v719
    %v724 = vpop.permute.xlu0 %723
    %727 = vset.pattern.permute.xlu0 0
    %728 = vperm.xlu0 %727, %v720
    %v729 = vpop.permute.xlu0 %728
    %v732 = vsel %vm329, %v717, 0
    %v735 = vsel %vm329, %v718, 0
    %737 = vmatprep.subr.mxu0 0.0
    %738 = vmatpush1.msra.mxu0 %v708
    %739 = vmatprep.subr.mxu0 0.0
    %740 = vmatpush1.msra.mxu0 %v709
    %741 = vmatprep.subr.mxu0 0.0
    %742 = vmatpush1.msra.mxu0 %v710
    %743 = vmatprep.subr.mxu0 0.0
    %744 = vmatpush1.msra.mxu0 %v711
    %745 = vmatprep.subr.mxu0 0.0
    %746 = vmatpush1.msra.mxu0 %v712
    %747 = vmatprep.subr.mxu0 0.0
    %748 = vmatpush1.msra.mxu0 %v713
    %749 = vmatprep.subr.mxu0 0.0
    %750 = vmatpush1.msra.mxu0 %v714
    %751 = vmatprep.subr.mxu0 0.0
    %752 = vmatpush1.msra.mxu0 %v715
    %753 = vmatprep.subr.mxu0 0.0
    %754 = vmatpush1.msra.mxu0 %v716
    %755 = vmatprep.subr.mxu0 0.0
    %756 = vmatpush1.msra.mxu0 0.0
    %757 = vmatprep.subr.mxu0 0.0
    %758 = vmatpush1.msra.mxu0 0.0
    %759 = vmatprep.subr.mxu0 0.0
    %760 = vmatpush1.msra.mxu0 0.0
    %761 = vmatprep.subr.mxu0 0.0
    %762 = vmatpush1.msra.mxu0 0.0
    %763 = vmatprep.subr.mxu0 0.0
    %764 = vmatpush1.msra.mxu0 0.0
    %765 = vmatprep.subr.mxu0 0.0
    %766 = vmatpush1.msra.mxu0 0.0
    %767 = vmatprep.subr.mxu0 0.0
    %768 = vmatpush1.msra.mxu0 0.0
    %769 = vmatprep.subr.mxu0 0.0
    %770 = vmatpush1.msra.mxu0 0.0
    %771 = vmatprep.subr.mxu0 0.0
    %772 = vmatpush1.msra.mxu0 0.0
    %773 = vmatprep.subr.mxu0 0.0
    %774 = vmatpush1.msra.mxu0 0.0
    %775 = vmatprep.subr.mxu0 0.0
    %776 = vmatpush1.msra.mxu0 0.0
    %777 = vmatprep.subr.mxu0 0.0
    %778 = vmatpush1.msra.mxu0 0.0
    %779 = vmatprep.subr.mxu0 0.0
    %780 = vmatpush1.msra.mxu0 0.0
    %781 = vmatprep.subr.mxu0 0.0
    %782 = vmatpush1.msra.mxu0 0.0
    %783 = vmatprep.subr.mxu0 0.0
    %784 = vmatpush1.msra.mxu0 0.0
    %785 = vmatprep.subr.mxu0 0.0
    %786 = vmatpush1.msra.mxu0 0.0
    %787 = vmatprep.subr.mxu0 0.0
    %788 = vmatpush1.msra.mxu0 0.0
    %789 = vmatprep.subr.mxu0 0.0
    %790 = vmatpush1.msra.mxu0 0.0
    %791 = vmatprep.subr.mxu0 0.0
    %792 = vmatpush1.msra.mxu0 0.0
    %793 = vmatprep.subr.mxu0 0.0
    %794 = vmatpush1.msra.mxu0 0.0
    %795 = vmatprep.subr.mxu0 0.0
    %796 = vmatpush1.msra.mxu0 0.0
    %797 = vmatprep.subr.mxu0 0.0
    %798 = vmatpush1.msra.mxu0 0.0
    %799 = vmatprep.subr.mxu0 0.0
    %800 = vmatpush1.msra.mxu0 0.0
    %801 = vmatprep.mubr.f32.mxu0 0.0
    %802 = vmatmul.mubr.f32.gmra.mrb[0].mxu0 %v732
    %v803 = vpop.f32.mrb[0].mxu0
    %v804 = vadd.f32 %v724, %v803
    %v805 = vpop.f32.mrb[0].mxu0
    %806 = vmatprep.mubr.f32.mxu0 0.0
    %807 = vmatmul.mubr.f32.gmra.mrb[0].mxu0 %v735
    %v808 = vpop.f32.mrb[0].mxu0
    %v809 = vadd.f32 %v729, %v808
    %v810 = vpop.f32.mrb[0].mxu0
    %811 = vdwg.mxu0
    %v812 = vmax.f32 %v804, 0.0
    %v813 = vmax.f32 %v809, 0.0
    %v814 = vld [vmem:[%s8] sm:$0xff]
    %v815 = vld [vmem:[%s8 + $0x8] sm:$0xff]
    %v816 = vld [vmem:[%s8 + $0x10] sm:$0xff]
    %v817 = vld [vmem:[%s8 + $0x18] sm:$0xff]
    %v818 = vld [vmem:[%s8 + $0x20] sm:$0xff]
    %v819 = vld [vmem:[%s8 + $0x28] sm:$0xff]
    %v820 = vld [vmem:[%s8 + $0x30] sm:$0xff]
    %v821 = vld [vmem:[%s8 + $0x38] sm:$0xff]
    %v822 = vld [vmem:[%s8 + $0x40] sm:$0xff]
    %v823 = vld [vmem:[%s8 + $0x48] sm:$0xff]
    %v824 = vld [vmem:[%s8 + $0x50] sm:$0xff]
    %v825 = vld [vmem:[%s8 + $0x58] sm:$0xff]
    %v826 = vld [vmem:[%s8 + $0x60] sm:$0xff]
    %v827 = vld [vmem:[%s8 + $0x68] sm:$0xff]
    %v828 = vld [vmem:[%s8 + $0x70] sm:$0xff]
    %v829 = vld [vmem:[%s8 + $0x78] sm:$0xff]
    %830 = vmatprep.subr.mxu0 0.0
    %831 = vmatpush1.msra.mxu0 %v814
    %832 = vmatprep.subr.mxu0 0.0
    %833 = vmatpush1.msra.mxu0 %v815
    %834 = vmatprep.subr.mxu0 0.0
    %835 = vmatpush1.msra.mxu0 %v816
    %836 = vmatprep.subr.mxu0 0.0
    %837 = vmatpush1.msra.mxu0 %v817
    %838 = vmatprep.subr.mxu0 0.0
    %839 = vmatpush1.msra.mxu0 %v818
    %840 = vmatprep.subr.mxu0 0.0
    %841 = vmatpush1.msra.mxu0 %v819
    %842 = vmatprep.subr.mxu0 0.0
    %843 = vmatpush1.msra.mxu0 %v820
    %844 = vmatprep.subr.mxu0 0.0
    %845 = vmatpush1.msra.mxu0 %v821
    %846 = vmatprep.subr.mxu0 0.0
    %847 = vmatpush1.msra.mxu0 %v822
    %848 = vmatprep.subr.mxu0 0.0
    %849 = vmatpush1.msra.mxu0 %v823
    %850 = vmatprep.subr.mxu0 0.0
    %851 = vmatpush1.msra.mxu0 %v824
    %852 = vmatprep.subr.mxu0 0.0
    %853 = vmatpush1.msra.mxu0 %v825
    %854 = vmatprep.subr.mxu0 0.0
    %855 = vmatpush1.msra.mxu0 %v826
    %856 = vmatprep.subr.mxu0 0.0
    %857 = vmatpush1.msra.mxu0 %v827
    %858 = vmatprep.subr.mxu0 0.0
    %859 = vmatpush1.msra.mxu0 %v828
    %860 = vmatprep.subr.mxu0 0.0
    %861 = vmatpush1.msra.mxu0 %v829
    %862 = vmatprep.subr.mxu0 0.0
    %863 = vmatpush1.msra.mxu0 0.0
    %864 = vmatprep.subr.mxu0 0.0
    %865 = vmatpush1.msra.mxu0 0.0
    %866 = vmatprep.subr.mxu0 0.0
    %867 = vmatpush1.msra.mxu0 0.0
    %868 = vmatprep.subr.mxu0 0.0
    %869 = vmatpush1.msra.mxu0 0.0
    %870 = vmatprep.subr.mxu0 0.0
    %871 = vmatpush1.msra.mxu0 0.0
    %872 = vmatprep.subr.mxu0 0.0
    %873 = vmatpush1.msra.mxu0 0.0
    %874 = vmatprep.subr.mxu0 0.0
    %875 = vmatpush1.msra.mxu0 0.0
    %876 = vmatprep.subr.mxu0 0.0
    %877 = vmatpush1.msra.mxu0 0.0
    %878 = vmatprep.subr.mxu0 0.0
    %879 = vmatpush1.msra.mxu0 0.0
    %880 = vmatprep.subr.mxu0 0.0
    %881 = vmatpush1.msra.mxu0 0.0
    %882 = vmatprep.subr.mxu0 0.0
    %883 = vmatpush1.msra.mxu0 0.0
    %884 = vmatprep.subr.mxu0 0.0
    %885 = vmatpush1.msra.mxu0 0.0
    %886 = vmatprep.subr.mxu0 0.0
    %887 = vmatpush1.msra.mxu0 0.0
    %888 = vmatprep.subr.mxu0 0.0
    %889 = vmatpush1.msra.mxu0 0.0
    %890 = vmatprep.subr.mxu0 0.0
    %891 = vmatpush1.msra.mxu0 0.0
    %892 = vmatprep.subr.mxu0 0.0
    %893 = vmatpush1.msra.mxu0 0.0
    %894 = vmatprep.mubr.f32.mxu0 0.0
    %895 = vmatmul.mubr.f32.gmra.mrb[0].mxu0 %v812
    %v896 = vpop.f32.mrb[0].mxu0
    %v897 = vadd.f32 0.0, %v896
    %v898 = vpop.f32.mrb[0].mxu0
    %899 = vmatprep.mubr.f32.mxu0 0.0
    %900 = vmatmul.mubr.f32.gmra.mrb[0].mxu0 %v813
    %v901 = vpop.f32.mrb[0].mxu0
    %v902 = vadd.f32 0.0, %v901
    %v903 = vpop.f32.mrb[0].mxu0
    %904 = vdwg.mxu0
    %v905 = vld [vmem:[#allocation9] sm:$0xff]
    %v906 = vld [vmem:[#allocation9 + $0x8] sm:$0xff]
    %v907 = vld [vmem:[#allocation9 + $0x10] sm:$0xff]
    %v908 = vld [vmem:[#allocation9 + $0x18] sm:$0xff]
    %v909 = vld [vmem:[#allocation9 + $0x20] sm:$0xff]
    %v910 = vld [vmem:[#allocation9 + $0x28] sm:$0xff]
    %v911 = vld [vmem:[#allocation9 + $0x30] sm:$0xff]
    %v912 = vld [vmem:[#allocation9 + $0x38] sm:$0xff]
    %v913 = vld [vmem:[#allocation9 + $0x40] sm:$0xff]
    %v914 = vld [vmem:[#allocation9 + $0x48] sm:$0xff]
    %v915 = vld [vmem:[#allocation9 + $0x50] sm:$0xff]
    %v916 = vld [vmem:[#allocation9 + $0x58] sm:$0xff]
    %v917 = vld [vmem:[#allocation9 + $0x60] sm:$0xff]
    %v918 = vld [vmem:[#allocation9 + $0x68] sm:$0xff]
    %v919 = vld [vmem:[#allocation9 + $0x70] sm:$0xff]
    %v920 = vld [vmem:[#allocation9 + $0x78] sm:$0xff]
    %vm921 = vcmask 261120
    %v923 = vsel %vm921, %v897, 0
    %v926 = vsel %vm921, %v902, 0
    %928 = vmatprep.subr.mxu0 %v906
    %929 = vmatpush1.msra.mxu0 %v905
    %930 = vmatprep.subr.mxu0 %v910
    %931 = vmatpush1.msra.mxu0 %v909
    %932 = vmatprep.subr.mxu0 %v914
    %933 = vmatpush1.msra.mxu0 %v913
    %934 = vmatprep.subr.mxu0 %v918
    %935 = vmatpush1.msra.mxu0 %v917
    %936 = vmatprep.subr.mxu0 0.0
    %937 = vmatpush1.msra.mxu0 0.0
    %938 = vmatprep.subr.mxu0 0.0
    %939 = vmatpush1.msra.mxu0 0.0
    %940 = vmatprep.subr.mxu0 0.0
    %941 = vmatpush1.msra.mxu0 0.0
    %942 = vmatprep.subr.mxu0 0.0
    %943 = vmatpush1.msra.mxu0 0.0
    %944 = vmatprep.subr.mxu0 0.0
    %945 = vmatpush1.msra.mxu0 0.0
    %946 = vmatprep.subr.mxu0 0.0
    %947 = vmatpush1.msra.mxu0 0.0
    %948 = vmatprep.subr.mxu0 0.0
    %949 = vmatpush1.msra.mxu0 0.0
    %950 = vmatprep.subr.mxu0 0.0
    %951 = vmatpush1.msra.mxu0 0.0
    %952 = vmatprep.subr.mxu0 0.0
    %953 = vmatpush1.msra.mxu0 0.0
    %954 = vmatprep.subr.mxu0 0.0
    %955 = vmatpush1.msra.mxu0 0.0
    %956 = vmatprep.subr.mxu0 0.0
    %957 = vmatpush1.msra.mxu0 0.0
    %958 = vmatprep.subr.mxu0 0.0
    %959 = vmatpush1.msra.mxu0 0.0
    %960 = vmatprep.subr.mxu0 0.0
    %961 = vmatpush1.msra.mxu0 0.0
    %962 = vmatprep.subr.mxu0 0.0
    %963 = vmatpush1.msra.mxu0 0.0
    %964 = vmatprep.subr.mxu0 0.0
    %965 = vmatpush1.msra.mxu0 0.0
    %966 = vmatprep.subr.mxu0 0.0
    %967 = vmatpush1.msra.mxu0 0.0
    %968 = vmatprep.subr.mxu0 0.0
    %969 = vmatpush1.msra.mxu0 0.0
    %970 = vmatprep.subr.mxu0 0.0
    %971 = vmatpush1.msra.mxu0 0.0
    %972 = vmatprep.subr.mxu0 0.0
    %973 = vmatpush1.msra.mxu0 0.0
    %974 = vmatprep.subr.mxu0 0.0
    %975 = vmatpush1.msra.mxu0 0.0
    %976 = vmatprep.subr.mxu0 0.0
    %977 = vmatpush1.msra.mxu0 0.0
    %978 = vmatprep.subr.mxu0 0.0
    %979 = vmatpush1.msra.mxu0 0.0
    %980 = vmatprep.subr.mxu0 0.0
    %981 = vmatpush1.msra.mxu0 0.0
    %982 = vmatprep.subr.mxu0 0.0
    %983 = vmatpush1.msra.mxu0 0.0
    %984 = vmatprep.subr.mxu0 0.0
    %985 = vmatpush1.msra.mxu0 0.0
    %986 = vmatprep.subr.mxu0 0.0
    %987 = vmatpush1.msra.mxu0 0.0
    %988 = vmatprep.subr.mxu0 0.0
    %989 = vmatpush1.msra.mxu0 0.0
    %990 = vmatprep.subr.mxu0 0.0
    %991 = vmatpush1.msra.mxu0 0.0
    %992 = vmatprep.mubr.f32.mxu0 0.0
    %993 = vmatmul.mubr.f32.gmra.mrb[0].mxu0 %v923
    %v994 = vpop.f32.mrb[0].mxu0
    %v995 = vadd.f32 0.0, %v994
    %v996 = vpop.f32.mrb[0].mxu0
    %v997 = vadd.f32 0.0, %v996
    %998 = vmatprep.mubr.f32.mxu0 0.0
    %999 = vmatmul.mubr.f32.gmra.mrb[0].mxu0 %v926
    %v1000 = vpop.f32.mrb[0].mxu0
    %v1001 = vadd.f32 0.0, %v1000
    %v1002 = vpop.f32.mrb[0].mxu0
    %v1003 = vadd.f32 0.0, %v1002
    %1004 = vdwg.mxu0
    %1005 = vmatprep.subr.mxu0 %v908
    %1006 = vmatpush1.msra.mxu0 %v907
    %1007 = vmatprep.subr.mxu0 %v912
    %1008 = vmatpush1.msra.mxu0 %v911
    %1009 = vmatprep.subr.mxu0 %v916
    %1010 = vmatpush1.msra.mxu0 %v915
    %1011 = vmatprep.subr.mxu0 %v920
    %1012 = vmatpush1.msra.mxu0 %v919
    %1013 = vmatprep.subr.mxu0 0.0
    %1014 = vmatpush1.msra.mxu0 0.0
    %1015 = vmatprep.subr.mxu0 0.0
    %1016 = vmatpush1.msra.mxu0 0.0
    %1017 = vmatprep.subr.mxu0 0.0
    %1018 = vmatpush1.msra.mxu0 0.0
    %1019 = vmatprep.subr.mxu0 0.0
    %1020 = vmatpush1.msra.mxu0 0.0
    %1021 = vmatprep.subr.mxu0 0.0
    %1022 = vmatpush1.msra.mxu0 0.0
    %1023 = vmatprep.subr.mxu0 0.0
    %1024 = vmatpush1.msra.mxu0 0.0
    %1025 = vmatprep.subr.mxu0 0.0
    %1026 = vmatpush1.msra.mxu0 0.0
    %1027 = vmatprep.subr.mxu0 0.0
    %1028 = vmatpush1.msra.mxu0 0.0
    %1029 = vmatprep.subr.mxu0 0.0
    %1030 = vmatpush1.msra.mxu0 0.0
    %1031 = vmatprep.subr.mxu0 0.0
    %1032 = vmatpush1.msra.mxu0 0.0
    %1033 = vmatprep.subr.mxu0 0.0
    %1034 = vmatpush1.msra.mxu0 0.0
    %1035 = vmatprep.subr.mxu0 0.0
    %1036 = vmatpush1.msra.mxu0 0.0
    %1037 = vmatprep.subr.mxu0 0.0
    %1038 = vmatpush1.msra.mxu0 0.0
    %1039 = vmatprep.subr.mxu0 0.0
    %1040 = vmatpush1.msra.mxu0 0.0
    %1041 = vmatprep.subr.mxu0 0.0
    %1042 = vmatpush1.msra.mxu0 0.0
    %1043 = vmatprep.subr.mxu0 0.0
    %1044 = vmatpush1.msra.mxu0 0.0
    %1045 = vmatprep.subr.mxu0 0.0
    %1046 = vmatpush1.msra.mxu0 0.0
    %1047 = vmatprep.subr.mxu0 0.0
    %1048 = vmatpush1.msra.mxu0 0.0
    %1049 = vmatprep.subr.mxu0 0.0
    %1050 = vmatpush1.msra.mxu0 0.0
    %1051 = vmatprep.subr.mxu0 0.0
    %1052 = vmatpush1.msra.mxu0 0.0
    %1053 = vmatprep.subr.mxu0 0.0
    %1054 = vmatpush1.msra.mxu0 0.0
    %1055 = vmatprep.subr.mxu0 0.0
    %1056 = vmatpush1.msra.mxu0 0.0
    %1057 = vmatprep.subr.mxu0 0.0
    %1058 = vmatpush1.msra.mxu0 0.0
    %1059 = vmatprep.subr.mxu0 0.0
    %1060 = vmatpush1.msra.mxu0 0.0
    %1061 = vmatprep.subr.mxu0 0.0
    %1062 = vmatpush1.msra.mxu0 0.0
    %1063 = vmatprep.subr.mxu0 0.0
    %1064 = vmatpush1.msra.mxu0 0.0
    %1065 = vmatprep.subr.mxu0 0.0
    %1066 = vmatpush1.msra.mxu0 0.0
    %1067 = vmatprep.subr.mxu0 0.0
    %1068 = vmatpush1.msra.mxu0 0.0
    %1069 = vmatprep.mubr.f32.mxu0 0.0
    %1070 = vmatmul.mubr.f32.gmra.mrb[0].mxu0 %v923
    %v1071 = vpop.f32.mrb[0].mxu0
    %v1072 = vadd.f32 0.0, %v1071
    %v1073 = vpop.f32.mrb[0].mxu0
    %v1074 = vadd.f32 0.0, %v1073
    %1075 = vmatprep.mubr.f32.mxu0 0.0
    %1076 = vmatmul.mubr.f32.gmra.mrb[0].mxu0 %v926
    %v1077 = vpop.f32.mrb[0].mxu0
    %v1078 = vadd.f32 0.0, %v1077
    %v1079 = vpop.f32.mrb[0].mxu0
    %v1080 = vadd.f32 0.0, %v1079
    %1081 = vdwg.mxu0
    %v1082 = vld [vmem:[#allocation10] sm:$0xff]
    %v1083 = vld [vmem:[#allocation10 + $0x8] sm:$0xff]
    %v1084 = vld [vmem:[#allocation10 + $0x10] sm:$0xff]
    %v1085 = vld [vmem:[#allocation10 + $0x18] sm:$0xff]
    %v1086 = vld [vmem:[#allocation10 + $0x20] sm:$0xff]
    %v1087 = vld [vmem:[#allocation10 + $0x28] sm:$0xff]
    %v1088 = vld [vmem:[#allocation10 + $0x30] sm:$0xff]
    %v1089 = vld [vmem:[#allocation10 + $0x38] sm:$0xff]
    %v1090 = vmul.f32 %v995, %v1082
    %v1091 = vmul.f32 %v997, %v1083
    %v1092 = vmul.f32 %v1072, %v1084
    %v1093 = vmul.f32 %v1074, %v1085
    %v1094 = vmul.f32 %v1001, %v1086
    %v1095 = vmul.f32 %v1003, %v1087
    %v1096 = vmul.f32 %v1078, %v1088
    %v1097 = vmul.f32 %v1080, %v1089
    %vm1098 = vcmask 130048
    %v1100 = vsel %vm1098, 1.0, 0
    %1102 = vmatprep.subr.mxu0 %v1091
    %1103 = vmatpush1.msra.mxu0 %v1090
    %1104 = vmatprep.subr.mxu0 %v1095
    %1105 = vmatpush1.msra.mxu0 %v1094
    %1106 = vmatprep.subr.mxu0 0.0
    %1107 = vmatpush1.msra.mxu0 0.0
    %1108 = vmatprep.subr.mxu0 0.0
    %1109 = vmatpush1.msra.mxu0 0.0
    %1110 = vmatprep.subr.mxu0 0.0
    %1111 = vmatpush1.msra.mxu0 0.0
    %1112 = vmatprep.subr.mxu0 0.0
    %1113 = vmatpush1.msra.mxu0 0.0
    %1114 = vmatprep.subr.mxu0 0.0
    %1115 = vmatpush1.msra.mxu0 0.0
    %1116 = vmatprep.subr.mxu0 0.0
    %1117 = vmatpush1.msra.mxu0 0.0
    %1118 = vmatprep.subr.mxu0 0.0
    %1119 = vmatpush1.msra.mxu0 0.0
    %1120 = vmatprep.subr.mxu0 0.0
    %1121 = vmatpush1.msra.mxu0 0.0
    %1122 = vmatprep.subr.mxu0 0.0
    %1123 = vmatpush1.msra.mxu0 0.0
    %1124 = vmatprep.subr.mxu0 0.0
    %1125 = vmatpush1.msra.mxu0 0.0
    %1126 = vmatprep.subr.mxu0 0.0
    %1127 = vmatpush1.msra.mxu0 0.0
    %1128 = vmatprep.subr.mxu0 0.0
    %1129 = vmatpush1.msra.mxu0 0.0
    %1130 = vmatprep.subr.mxu0 0.0
    %1131 = vmatpush1.msra.mxu0 0.0
    %1132 = vmatprep.subr.mxu0 0.0
    %1133 = vmatpush1.msra.mxu0 0.0
    %1134 = vmatprep.subr.mxu0 0.0
    %1135 = vmatpush1.msra.mxu0 0.0
    %1136 = vmatprep.subr.mxu0 0.0
    %1137 = vmatpush1.msra.mxu0 0.0
    %1138 = vmatprep.subr.mxu0 0.0
    %1139 = vmatpush1.msra.mxu0 0.0
    %1140 = vmatprep.subr.mxu0 0.0
    %1141 = vmatpush1.msra.mxu0 0.0
    %1142 = vmatprep.subr.mxu0 0.0
    %1143 = vmatpush1.msra.mxu0 0.0
    %1144 = vmatprep.subr.mxu0 0.0
    %1145 = vmatpush1.msra.mxu0 0.0
    %1146 = vmatprep.subr.mxu0 0.0
    %1147 = vmatpush1.msra.mxu0 0.0
    %1148 = vmatprep.subr.mxu0 0.0
    %1149 = vmatpush1.msra.mxu0 0.0
    %1150 = vmatprep.subr.mxu0 0.0
    %1151 = vmatpush1.msra.mxu0 0.0
    %1152 = vmatprep.subr.mxu0 0.0
    %1153 = vmatpush1.msra.mxu0 0.0
    %1154 = vmatprep.subr.mxu0 0.0
    %1155 = vmatpush1.msra.mxu0 0.0
    %1156 = vmatprep.subr.mxu0 0.0
    %1157 = vmatpush1.msra.mxu0 0.0
    %1158 = vmatprep.subr.mxu0 0.0
    %1159 = vmatpush1.msra.mxu0 0.0
    %1160 = vmatprep.subr.mxu0 0.0
    %1161 = vmatpush1.msra.mxu0 0.0
    %1162 = vmatprep.subr.mxu0 0.0
    %1163 = vmatpush1.msra.mxu0 0.0
    %1164 = vmatprep.subr.mxu0 0.0
    %1165 = vmatpush1.msra.mxu0 0.0
    %1166 = vmatprep.mubr.f32.mxu0 0.0
    %1167 = vmatmul.mubr.f32.gmra.mrb[0].mxu0 %v1100
    %v1168 = vpop.f32.mrb[0].mxu0
    %v1169 = vadd.f32 0.0, %v1168
    %v1170 = vpop.f32.mrb[0].mxu0
    %v1171 = vadd.f32 0.0, %v1170
    %1172 = vdwg.mxu0
    %1173 = vmatprep.subr.mxu0 %v1093
    %1174 = vmatpush1.msra.mxu0 %v1092
    %1175 = vmatprep.subr.mxu0 %v1097
    %1176 = vmatpush1.msra.mxu0 %v1096
    %1177 = vmatprep.subr.mxu0 0.0
    %1178 = vmatpush1.msra.mxu0 0.0
    %1179 = vmatprep.subr.mxu0 0.0
    %1180 = vmatpush1.msra.mxu0 0.0
    %1181 = vmatprep.subr.mxu0 0.0
    %1182 = vmatpush1.msra.mxu0 0.0
    %1183 = vmatprep.subr.mxu0 0.0
    %1184 = vmatpush1.msra.mxu0 0.0
    %1185 = vmatprep.subr.mxu0 0.0
    %1186 = vmatpush1.msra.mxu0 0.0
    %1187 = vmatprep.subr.mxu0 0.0
    %1188 = vmatpush1.msra.mxu0 0.0
    %1189 = vmatprep.subr.mxu0 0.0
    %1190 = vmatpush1.msra.mxu0 0.0
    %1191 = vmatprep.subr.mxu0 0.0
    %1192 = vmatpush1.msra.mxu0 0.0
    %1193 = vmatprep.subr.mxu0 0.0
    %1194 = vmatpush1.msra.mxu0 0.0
    %1195 = vmatprep.subr.mxu0 0.0
    %1196 = vmatpush1.msra.mxu0 0.0
    %1197 = vmatprep.subr.mxu0 0.0
    %1198 = vmatpush1.msra.mxu0 0.0
    %1199 = vmatprep.subr.mxu0 0.0
    %1200 = vmatpush1.msra.mxu0 0.0
    %1201 = vmatprep.subr.mxu0 0.0
    %1202 = vmatpush1.msra.mxu0 0.0
    %1203 = vmatprep.subr.mxu0 0.0
    %1204 = vmatpush1.msra.mxu0 0.0
    %1205 = vmatprep.subr.mxu0 0.0
    %1206 = vmatpush1.msra.mxu0 0.0
    %1207 = vmatprep.subr.mxu0 0.0
    %1208 = vmatpush1.msra.mxu0 0.0
    %1209 = vmatprep.subr.mxu0 0.0
    %1210 = vmatpush1.msra.mxu0 0.0
    %1211 = vmatprep.subr.mxu0 0.0
    %1212 = vmatpush1.msra.mxu0 0.0
    %1213 = vmatprep.subr.mxu0 0.0
    %1214 = vmatpush1.msra.mxu0 0.0
    %1215 = vmatprep.subr.mxu0 0.0
    %1216 = vmatpush1.msra.mxu0 0.0
    %1217 = vmatprep.subr.mxu0 0.0
    %1218 = vmatpush1.msra.mxu0 0.0
    %1219 = vmatprep.subr.mxu0 0.0
    %1220 = vmatpush1.msra.mxu0 0.0
    %1221 = vmatprep.subr.mxu0 0.0
    %1222 = vmatpush1.msra.mxu0 0.0
    %1223 = vmatprep.subr.mxu0 0.0
    %1224 = vmatpush1.msra.mxu0 0.0
    %1225 = vmatprep.subr.mxu0 0.0
    %1226 = vmatpush1.msra.mxu0 0.0
    %1227 = vmatprep.subr.mxu0 0.0
    %1228 = vmatpush1.msra.mxu0 0.0
    %1229 = vmatprep.subr.mxu0 0.0
    %1230 = vmatpush1.msra.mxu0 0.0
    %1231 = vmatprep.subr.mxu0 0.0
    %1232 = vmatpush1.msra.mxu0 0.0
    %1233 = vmatprep.subr.mxu0 0.0
    %1234 = vmatpush1.msra.mxu0 0.0
    %1235 = vmatprep.subr.mxu0 0.0
    %1236 = vmatpush1.msra.mxu0 0.0
    %1237 = vmatprep.mubr.f32.mxu0 0.0
    %1238 = vmatmul.mubr.f32.gmra.mrb[0].mxu0 %v1100
    %v1239 = vpop.f32.mrb[0].mxu0
    %v1240 = vadd.f32 0.0, %v1239
    %v1241 = vpop.f32.mrb[0].mxu0
    %v1242 = vadd.f32 0.0, %v1241
    %1243 = vdwg.mxu0
    %v1244 = vld [vmem:[#allocation12] sm:$0xff]
    %v1245 = vld [vmem:[#allocation12 + $0x8] sm:$0xff]
    %v1246 = vld [vmem:[#allocation12 + $0x10] sm:$0xff]
    %v1247 = vld [vmem:[#allocation12 + $0x18] sm:$0xff]
    %v1248 = vld [vmem:[#allocation12 + $0x20] sm:$0xff]
    %v1249 = vld [vmem:[#allocation12 + $0x28] sm:$0xff]
    %v1250 = vld [vmem:[#allocation12 + $0x30] sm:$0xff]
    %v1251 = vld [vmem:[#allocation12 + $0x38] sm:$0xff]
    %v1252 = vld [vmem:[#allocation12 + $0x40] sm:$0xff]
    %v1253 = vld [vmem:[#allocation12 + $0x48] sm:$0xff]
    %v1254 = vld [vmem:[#allocation12 + $0x50] sm:$0xff]
    %v1255 = vld [vmem:[#allocation12 + $0x58] sm:$0xff]
    %v1256 = vld [vmem:[#allocation12 + $0x60] sm:$0xff]
    %v1257 = vld [vmem:[#allocation12 + $0x68] sm:$0xff]
    %v1258 = vld [vmem:[#allocation12 + $0x70] sm:$0xff]
    %v1259 = vld [vmem:[#allocation12 + $0x78] sm:$0xff]
    %v1260 = vld [vmem:[#allocation12 + $0x80] sm:$0xff]
    %v1261 = vld [vmem:[#allocation12 + $0x88] sm:$0xff]
    %v1262 = vld [vmem:[#allocation12 + $0x90] sm:$0xff]
    %v1263 = vld [vmem:[#allocation12 + $0x98] sm:$0xff]
    %v1264 = vld [vmem:[#allocation12 + $0xa0] sm:$0xff]
    %v1265 = vld [vmem:[#allocation12 + $0xa8] sm:$0xff]
    %v1266 = vld [vmem:[#allocation12 + $0xb0] sm:$0xff]
    %v1267 = vld [vmem:[#allocation12 + $0xb8] sm:$0xff]
    %v1268 = vld [vmem:[#allocation12 + $0xc0] sm:$0xff]
    %v1269 = vld [vmem:[#allocation12 + $0xc8] sm:$0xff]
    %v1270 = vld [vmem:[#allocation12 + $0xd0] sm:$0xff]
    %v1271 = vld [vmem:[#allocation12 + $0xd8] sm:$0xff]
    %v1272 = vld [vmem:[#allocation12 + $0xe0] sm:$0xff]
    %v1273 = vld [vmem:[#allocation12 + $0xe8] sm:$0xff]
    %v1274 = vld [vmem:[#allocation12 + $0xf0] sm:$0xff]
    %v1275 = vld [vmem:[#allocation12 + $0xf8] sm:$0xff]
    %v1276 = vld [vmem:[#allocation12 + $0x100] sm:$0xff]
    %v1277 = vld [vmem:[#allocation12 + $0x108] sm:$0xff]
    %v1278 = vld [vmem:[#allocation12 + $0x110] sm:$0xff]
    %v1279 = vld [vmem:[#allocation12 + $0x118] sm:$0xff]
    %v1280 = vld [vmem:[#allocation12 + $0x120] sm:$0xff]
    %v1281 = vld [vmem:[#allocation12 + $0x128] sm:$0xff]
    %v1282 = vld [vmem:[#allocation12 + $0x130] sm:$0xff]
    %v1283 = vld [vmem:[#allocation12 + $0x138] sm:$0xff]
    %v1284 = vld [vmem:[#allocation12 + $0x140] sm:$0xff]
    %v1285 = vld [vmem:[#allocation12 + $0x148] sm:$0xff]
    %v1286 = vld [vmem:[#allocation12 + $0x150] sm:$0xff]
    %v1287 = vld [vmem:[#allocation12 + $0x158] sm:$0xff]
    %v1288 = vld [vmem:[#allocation12 + $0x160] sm:$0xff]
    %v1289 = vld [vmem:[#allocation12 + $0x168] sm:$0xff]
    %v1290 = vld [vmem:[#allocation12 + $0x170] sm:$0xff]
    %v1291 = vld [vmem:[#allocation12 + $0x178] sm:$0xff]
    %v1292 = vld [vmem:[#allocation12 + $0x180] sm:$0xff]
    %v1293 = vld [vmem:[#allocation12 + $0x188] sm:$0xff]
    %v1294 = vld [vmem:[#allocation12 + $0x190] sm:$0xff]
    %v1295 = vld [vmem:[#allocation12 + $0x198] sm:$0xff]
    %v1296 = vld [vmem:[#allocation12 + $0x1a0] sm:$0xff]
    %v1297 = vld [vmem:[#allocation12 + $0x1a8] sm:$0xff]
    %v1298 = vld [vmem:[#allocation12 + $0x1b0] sm:$0xff]
    %v1299 = vld [vmem:[#allocation12 + $0x1b8] sm:$0xff]
    %v1300 = vld [vmem:[#allocation12 + $0x1c0] sm:$0xff]
    %v1301 = vld [vmem:[#allocation12 + $0x1c8] sm:$0xff]
    %v1302 = vld [vmem:[#allocation12 + $0x1d0] sm:$0xff]
    %v1303 = vld [vmem:[#allocation12 + $0x1d8] sm:$0xff]
    %v1304 = vld [vmem:[#allocation12 + $0x1e0] sm:$0xff]
    %v1305 = vld [vmem:[#allocation12 + $0x1e8] sm:$0xff]
    %v1306 = vld [vmem:[#allocation12 + $0x1f0] sm:$0xff]
    %v1307 = vld [vmem:[#allocation12 + $0x1f8] sm:$0xff]
    %v1308 = vld [vmem:[%s12] sm:$0x1]
    %1309 = vmatprep.subr.mxu0 0.0
    %1310 = vmatpush1.msra.mxu0 %v1244
    %1311 = vmatprep.subr.mxu0 0.0
    %1312 = vmatpush1.msra.mxu0 %v1245
    %1313 = vmatprep.subr.mxu0 0.0
    %1314 = vmatpush1.msra.mxu0 %v1246
    %1315 = vmatprep.subr.mxu0 0.0
    %1316 = vmatpush1.msra.mxu0 %v1247
    %1317 = vmatprep.subr.mxu0 0.0
    %1318 = vmatpush1.msra.mxu0 %v1248
    %1319 = vmatprep.subr.mxu0 0.0
    %1320 = vmatpush1.msra.mxu0 %v1249
    %1321 = vmatprep.subr.mxu0 0.0
    %1322 = vmatpush1.msra.mxu0 %v1250
    %1323 = vmatprep.subr.mxu0 0.0
    %1324 = vmatpush1.msra.mxu0 %v1251
    %1325 = vmatprep.subr.mxu0 0.0
    %1326 = vmatpush1.msra.mxu0 %v1252
    %1327 = vmatprep.subr.mxu0 0.0
    %1328 = vmatpush1.msra.mxu0 %v1253
    %1329 = vmatprep.subr.mxu0 0.0
    %1330 = vmatpush1.msra.mxu0 %v1254
    %1331 = vmatprep.subr.mxu0 0.0
    %1332 = vmatpush1.msra.mxu0 %v1255
    %1333 = vmatprep.subr.mxu0 0.0
    %1334 = vmatpush1.msra.mxu0 %v1256
    %1335 = vmatprep.subr.mxu0 0.0
    %1336 = vmatpush1.msra.mxu0 %v1257
    %1337 = vmatprep.subr.mxu0 0.0
    %1338 = vmatpush1.msra.mxu0 %v1258
    %1339 = vmatprep.subr.mxu0 0.0
    %1340 = vmatpush1.msra.mxu0 %v1259
    %1341 = vmatprep.subr.mxu0 0.0
    %1342 = vmatpush1.msra.mxu0 %v1260
    %1343 = vmatprep.subr.mxu0 0.0
    %1344 = vmatpush1.msra.mxu0 %v1261
    %1345 = vmatprep.subr.mxu0 0.0
    %1346 = vmatpush1.msra.mxu0 %v1262
    %1347 = vmatprep.subr.mxu0 0.0
    %1348 = vmatpush1.msra.mxu0 %v1263
    %1349 = vmatprep.subr.mxu0 0.0
    %1350 = vmatpush1.msra.mxu0 %v1264
    %1351 = vmatprep.subr.mxu0 0.0
    %1352 = vmatpush1.msra.mxu0 %v1265
    %1353 = vmatprep.subr.mxu0 0.0
    %1354 = vmatpush1.msra.mxu0 %v1266
    %1355 = vmatprep.subr.mxu0 0.0
    %1356 = vmatpush1.msra.mxu0 %v1267
    %1357 = vmatprep.subr.mxu0 0.0
    %1358 = vmatpush1.msra.mxu0 %v1268
    %1359 = vmatprep.subr.mxu0 0.0
    %1360 = vmatpush1.msra.mxu0 %v1269
    %1361 = vmatprep.subr.mxu0 0.0
    %1362 = vmatpush1.msra.mxu0 %v1270
    %1363 = vmatprep.subr.mxu0 0.0
    %1364 = vmatpush1.msra.mxu0 %v1271
    %1365 = vmatprep.subr.mxu0 0.0
    %1366 = vmatpush1.msra.mxu0 %v1272
    %1367 = vmatprep.subr.mxu0 0.0
    %1368 = vmatpush1.msra.mxu0 %v1273
    %1369 = vmatprep.subr.mxu0 0.0
    %1370 = vmatpush1.msra.mxu0 %v1274
    %1371 = vmatprep.subr.mxu0 0.0
    %1372 = vmatpush1.msra.mxu0 %v1275
    %1373 = vmatprep.mubr.f32.mxu0 %v1171
    %1374 = vmatmul.mubr.f32.gmra.mrb[0].mxu0 %v1169
    %v1375 = vpop.f32.mrb[0].mxu0
    %v1376 = vadd.f32 %v1308, %v1375
    %v1377 = vpop.f32.mrb[0].mxu0
    %1378 = vdwg.mxu0
    %1379 = vmatprep.subr.mxu0 0.0
    %1380 = vmatpush1.msra.mxu0 %v1276
    %1381 = vmatprep.subr.mxu0 0.0
    %1382 = vmatpush1.msra.mxu0 %v1277
    %1383 = vmatprep.subr.mxu0 0.0
    %1384 = vmatpush1.msra.mxu0 %v1278
    %1385 = vmatprep.subr.mxu0 0.0
    %1386 = vmatpush1.msra.mxu0 %v1279
    %1387 = vmatprep.subr.mxu0 0.0
    %1388 = vmatpush1.msra.mxu0 %v1280
    %1389 = vmatprep.subr.mxu0 0.0
    %1390 = vmatpush1.msra.mxu0 %v1281
    %1391 = vmatprep.subr.mxu0 0.0
    %1392 = vmatpush1.msra.mxu0 %v1282
    %1393 = vmatprep.subr.mxu0 0.0
    %1394 = vmatpush1.msra.mxu0 %v1283
    %1395 = vmatprep.subr.mxu0 0.0
    %1396 = vmatpush1.msra.mxu0 %v1284
    %1397 = vmatprep.subr.mxu0 0.0
    %1398 = vmatpush1.msra.mxu0 %v1285
    %1399 = vmatprep.subr.mxu0 0.0
    %1400 = vmatpush1.msra.mxu0 %v1286
    %1401 = vmatprep.subr.mxu0 0.0
    %1402 = vmatpush1.msra.mxu0 %v1287
    %1403 = vmatprep.subr.mxu0 0.0
    %1404 = vmatpush1.msra.mxu0 %v1288
    %1405 = vmatprep.subr.mxu0 0.0
    %1406 = vmatpush1.msra.mxu0 %v1289
    %1407 = vmatprep.subr.mxu0 0.0
    %1408 = vmatpush1.msra.mxu0 %v1290
    %1409 = vmatprep.subr.mxu0 0.0
    %1410 = vmatpush1.msra.mxu0 %v1291
    %1411 = vmatprep.subr.mxu0 0.0
    %1412 = vmatpush1.msra.mxu0 %v1292
    %1413 = vmatprep.subr.mxu0 0.0
    %1414 = vmatpush1.msra.mxu0 %v1293
    %1415 = vmatprep.subr.mxu0 0.0
    %1416 = vmatpush1.msra.mxu0 %v1294
    %1417 = vmatprep.subr.mxu0 0.0
    %1418 = vmatpush1.msra.mxu0 %v1295
    %1419 = vmatprep.subr.mxu0 0.0
    %1420 = vmatpush1.msra.mxu0 %v1296
    %1421 = vmatprep.subr.mxu0 0.0
    %1422 = vmatpush1.msra.mxu0 %v1297
    %1423 = vmatprep.subr.mxu0 0.0
    %1424 = vmatpush1.msra.mxu0 %v1298
    %1425 = vmatprep.subr.mxu0 0.0
    %1426 = vmatpush1.msra.mxu0 %v1299
    %1427 = vmatprep.subr.mxu0 0.0
    %1428 = vmatpush1.msra.mxu0 %v1300
    %1429 = vmatprep.subr.mxu0 0.0
    %1430 = vmatpush1.msra.mxu0 %v1301
    %1431 = vmatprep.subr.mxu0 0.0
    %1432 = vmatpush1.msra.mxu0 %v1302
    %1433 = vmatprep.subr.mxu0 0.0
    %1434 = vmatpush1.msra.mxu0 %v1303
    %1435 = vmatprep.subr.mxu0 0.0
    %1436 = vmatpush1.msra.mxu0 %v1304
    %1437 = vmatprep.subr.mxu0 0.0
    %1438 = vmatpush1.msra.mxu0 %v1305
    %1439 = vmatprep.subr.mxu0 0.0
    %1440 = vmatpush1.msra.mxu0 %v1306
    %1441 = vmatprep.subr.mxu0 0.0
    %1442 = vmatpush1.msra.mxu0 %v1307
    %1443 = vmatprep.mubr.f32.mxu0 %v1242
    %1444 = vmatmul.mubr.f32.gmra.mrb[0].mxu0 %v1240
    %v1445 = vpop.f32.mrb[0].mxu0
    %v1446 = vadd.f32 %v1376, %v1445
    %v1447 = vpop.f32.mrb[0].mxu0
    %1448 = vdwg.mxu0
    %1449 = vst [vmem:[%s13] sm:$0xff] %v475
    %1450 = vst [vmem:[%s13 + $0x8] sm:$0xff] %v476
    %1451 = vst [vmem:[%s13 + $0x10] sm:$0xff] %v477
    %1452 = vst [vmem:[%s13 + $0x18] sm:$0xff] %v478
    %v1457 = vcombine.low %v1169, %v1171
    %v1458 = vcombine.low %v1240, %v1242
    %v1460 = vunpack.c.l.s4 1966171168
    %v1461 = vunpack.c.0.s8 %v1460
    %v1462 = vlaneseq
    %v1463 = vshrl.u32 %v1462, 7
    %v1464 = vsub.s32 %v1461, %v1463
    %v1465 = vrot.slane %v1457, %v1464
    %v1467 = vunpack.c.l.s4 1966171168
    %v1468 = vunpack.c.0.s8 %v1467
    %v1469 = vlaneseq
    %v1470 = vshrl.u32 %v1469, 7
    %v1471 = vsub.s32 %v1468, %v1470
    %v1472 = vrot.slane %v1458, %v1471
    %v1473 = vcombine.low %v1465, %v1472
    %v1475 = vunpack.c.l.s4 1966171168
    %v1476 = vunpack.c.0.s8 %v1475
    %v1477 = vlaneseq
    %v1478 = vshrl.u32 %v1477, 7
    %v1479 = vsub.s32 %v1476, %v1478
    %v1480 = vrot.slane %v1473, %v1479
    %v1482 = vlaneseq
    %vm1483 = vcmp.ge.s32.totalorder %v1482, 0
    %vm1484 = vcmp.lt.s32.totalorder %v1482, 512
    %vm1485 = vmand %vm1483, %vm1484
    %1486 = vst.msk [vmem:[%s14] sm:$0xf] %vm1485, %v1480
    %vm1487 = vcmask 155648
    %1488 = vst.msk [vmem:[%s15] sm:$0x1] %vm1487, %v1446
    // Predicated region
    $region82: #{forward.1} parent=1 // pred_check
      _
    $region83: #{forward.1} parent=1 // pred_check_branch
      %1490 = sbr.rel (0) target = $region85
    $region84: #{forward.1} parent=1 // pred_region
      _
    $region85: #{forward.1} parent=1 // pred_fallthru
      _
    // Predicated region
    $region86: #{forward.1} parent=1 // pred_check
      _
    $region87: #{forward.1} parent=1 // pred_check_branch
      %1492 = sbr.rel (0) target = $region89
    $region88: #{forward.1} parent=1 // pred_region
      _
    $region89: #{forward.1} parent=1 // pred_fallthru
      _
    // Predicated region
    $region90: #{forward.1} parent=1 // pred_check
      _
    $region91: #{forward.1} parent=1 // pred_check_branch
      %1494 = sbr.rel (0) target = $region93
    $region92: #{forward.1} parent=1 // pred_region
      _
    $region93: #{forward.1} parent=1 // pred_fallthru
      _
    // Predicated region
    $region94: #{forward.1} parent=1 // pred_check
      _
    $region95: #{forward.1} parent=1 // pred_check_branch
      %1496 = sbr.rel (0) target = $region97
    $region96: #{forward.1} parent=1 // pred_region
      _
    $region97: #{forward.1} parent=1 // pred_fallthru
      _
    // Predicated region
    $region98: #{forward.1} parent=1 // pred_check
      _
    $region99: #{forward.1} parent=1 // pred_check_branch
      %1498 = sbr.rel (0) target = $region101
    $region100: #{forward.1} parent=1 // pred_region
      _
    $region101: #{forward.1} parent=1 // pred_fallthru
      _
    // Predicated region
    $region102: #{forward.1} parent=1 // pred_check
      _
    $region103: #{forward.1} parent=1 // pred_check_branch
      %1500 = sbr.rel (0) target = $region105
    $region104: #{forward.1} parent=1 // pred_region
      _
    $region105: #{forward.1} parent=1 // pred_fallthru
      _
    %1501 = vsyncpa [#allocation3], 1
    %1502 = vsyncpa [#allocation5], 1
    %1503 = vsyncpa [#allocation8], 1
    %1504 = vsyncpa [#allocation11], 1

</llo_original>
